<compile_context>
chip_gen: v7x
topology: tpu7x:2x2x1
jax: 0.10.0
libtpu: 0.0.40
codegen_flags: <defaults>
</compile_context>

<pallas_src>
import jax
import jax.numpy as jnp
from jax import lax
from jax.experimental import pallas as pl
from jax.experimental.pallas import tpu as pltpu


def _make_tail_kernel(H, W, Cin, Cmid, K, pad, leaky_slope):
    """Fused (conv1 + affine + LeakyReLU + conv2 + bias) kernel factory.

    Internal representation per sample: a channel-major, flattened, zero-
    padded spatial frame (C, Hp*Wp) with the flat spatial index on the lane
    axis.  For kernel tap (kh, kw) the contribution at output position
    p = h*Wp + w is frame[:, p + kh*Wp + kw], so im2col is just K*K static
    lane-offset slices stacked along the sublane axis, followed by a single
    (Cout, K*K*Cin) x (K*K*Cin, Npos) matmul.  Columns whose w >= Wo are
    garbage (row wrap) and are simply never read back.
    """
    Hp1, Wp1 = H + 2 * pad, W + 2 * pad
    Ho1, Wo1 = Hp1 - K + 1, Wp1 - K + 1
    Hp2, Wp2 = Ho1 + 2 * pad, Wo1 + 2 * pad
    Ho2, Wo2 = Hp2 - K + 1, Wp2 - K + 1
    # flat length covering every valid output position p = h*Wp + w;
    # max tap offset (K-1)*(Wp+1) + n - 1 == Hp*Wp - 1, so slices never OOB.
    n1 = (Ho1 - 1) * Wp1 + Wo1
    n2 = (Ho2 - 1) * Wp2 + Wo2

    def kernel(x_ref, w1_ref, s1_ref, t1_ref, w2_ref, b2_ref, out_ref,
               xpad_s, ypad_s):
        f32 = jnp.float32

        # ---- stage 0: zero-padded flattened input frame in VMEM ----------
        xpad_s[...] = jnp.zeros_like(xpad_s)
        for h in range(H):                               # static, unrolled
            dst = (h + pad) * Wp1 + pad
            xpad_s[:, dst:dst + W] = x_ref[:, h * W:(h + 1) * W].astype(f32)
        xflat = xpad_s[...]                              # (Cin, Hp1*Wp1)

        # ---- stage 1: conv1 as one im2col matmul (contraction K*K*Cin) ---
        taps = []
        for kh in range(K):
            for kw in range(K):
                off = kh * Wp1 + kw
                taps.append(xflat[:, off:off + n1])      # (Cin, n1)
        patches1 = jnp.concatenate(taps, axis=0)         # (K*K*Cin, n1)
        y1 = jnp.dot(w1_ref[...], patches1,
                     preferred_element_type=f32)         # (Cmid, n1)
        y1 = y1 * s1_ref[...] + t1_ref[...]              # folded BatchNorm
        y1 = jnp.where(y1 > 0, y1, leaky_slope * y1)     # LeakyReLU(0.2)

        # ---- stage 2: re-embed valid conv1 output into padded frame 2 ----
        ypad_s[...] = jnp.zeros_like(ypad_s)
        for h in range(Ho1):                             # static, unrolled
            dst = (h + pad) * Wp2 + pad
            ypad_s[:, dst:dst + Wo1] = y1[:, h * Wp1:h * Wp1 + Wo1]
        yflat = ypad_s[...]                              # (Cmid, Hp2*Wp2)

        # ---- stage 3: conv2 + bias (contraction K*K*Cmid) -----------------
        taps2 = []
        for kh in range(K):
            for kw in range(K):
                off = kh * Wp2 + kw
                taps2.append(yflat[:, off:off + n2])     # (Cmid, n2)
        patches2 = jnp.concatenate(taps2, axis=0)        # (K*K*Cmid, n2)
        z = jnp.dot(w2_ref[...], patches2,
                    preferred_element_type=f32)          # (1, n2)
        z = z + b2_ref[...]

        # ---- stage 4: compact valid columns into lane-dense output -------
        for h in range(Ho2):                             # static, unrolled
            out_ref[:, h * Wo2:(h + 1) * Wo2] = \
                z[:, h * Wp2:h * Wp2 + Wo2].astype(out_ref.dtype)

    return kernel, (Hp1, Wp1, Hp2, Wp2, Ho2, Wo2)


def discriminator_tail_forward(x_nchw, w1_oihw, gamma, beta, r_mean, r_var,
                               eps, w2_oihw, b2):
    """DicsriminatorTail forward (eval-mode BatchNorm), NCHW in / NCHW out."""
    N, Cin, H, W = x_nchw.shape
    Cmid = w1_oihw.shape[0]
    K = w1_oihw.shape[2]
    pad = (K - 1 + 1) // 2  # ceil((kw-1)/2) = 2 for kw=4

    # Parameter prep (wrapper-side, one-time): fold eval-mode BN into a
    # per-channel affine and reshape weights to (Cout, K*K*Cin) im2col form.
    scale1 = (gamma / jnp.sqrt(r_var + eps)).astype(jnp.float32)
    shift1 = (beta - r_mean * scale1).astype(jnp.float32)
    w1_2d = jnp.transpose(w1_oihw, (0, 2, 3, 1)).reshape(Cmid, K * K * Cin)
    w2_2d = jnp.transpose(w2_oihw, (0, 2, 3, 1)).reshape(1, K * K * Cmid)

    kernel, dims = _make_tail_kernel(H, W, Cin, Cmid, K, pad, 0.2)
    Hp1, Wp1, Hp2, Wp2, Ho2, Wo2 = dims

    out_flat = pl.pallas_call(
        kernel,
        out_shape=jax.ShapeDtypeStruct((N, 1, Ho2 * Wo2), jnp.float32),
        grid_spec=pltpu.PrefetchScalarGridSpec(
            num_scalar_prefetch=0,
            grid=(N,),
            in_specs=[
                pl.BlockSpec((None, Cin, H * W), lambda n: (n, 0, 0)),
                pl.BlockSpec((Cmid, K * K * Cin), lambda n: (0, 0)),
                pl.BlockSpec((Cmid, 1), lambda n: (0, 0)),
                pl.BlockSpec((Cmid, 1), lambda n: (0, 0)),
                pl.BlockSpec((1, K * K * Cmid), lambda n: (0, 0)),
                pl.BlockSpec((1, 1), lambda n: (0, 0)),
            ],
            out_specs=pl.BlockSpec((None, 1, Ho2 * Wo2), lambda n: (n, 0, 0)),
            scratch_shapes=[
                pltpu.VMEM((Cin, Hp1 * Wp1), jnp.float32),   # padded input
                pltpu.VMEM((Cmid, Hp2 * Wp2), jnp.float32),  # padded interm.
            ],
        ),
        compiler_params=pltpu.CompilerParams(
            dimension_semantics=("parallel",)),
    )(
        x_nchw.reshape(N, Cin, H * W).astype(jnp.float32),
        w1_2d.astype(jnp.float32),
        scale1.reshape(Cmid, 1),
        shift1.reshape(Cmid, 1),
        w2_2d.astype(jnp.float32),
        b2.reshape(1, 1).astype(jnp.float32),
    )
    return out_flat.reshape(N, 1, Ho2, Wo2)


def _reference(x, w1, gamma, beta, r_mean, r_var, eps, w2, b2):
    """Pure-JAX reference (lax.conv, NCHW) for correctness check."""
    dn1 = lax.conv_dimension_numbers(x.shape, w1.shape,
                                     ("NCHW", "OIHW", "NCHW"))
    y = lax.conv_general_dilated(x, w1, (1, 1), [(2, 2), (2, 2)],
                                 dimension_numbers=dn1)
    scale = (gamma / jnp.sqrt(r_var + eps)).reshape(1, -1, 1, 1)
    shift = (beta - r_mean * gamma / jnp.sqrt(r_var + eps)).reshape(1, -1, 1, 1)
    y = y * scale + shift
    y = jnp.where(y > 0, y, 0.2 * y)
    dn2 = lax.conv_dimension_numbers(y.shape, w2.shape,
                                     ("NCHW", "OIHW", "NCHW"))
    z = lax.conv_general_dilated(y, w2, (1, 1), [(2, 2), (2, 2)],
                                 dimension_numbers=dn2)
    return z + b2.reshape(1, -1, 1, 1)


if __name__ == "__main__":
    # Small shapes consistent with the module: ndf=4, nf_mult_prev=1,
    # n_layers=1  ->  Cin = 4, Cmid = ndf * min(2**n_layers, 8) = 8.
    ndf, nf_mult_prev, n_layers = 4, 1, 1
    nf_mult = min(2 ** n_layers, 8)
    cin = ndf * nf_mult_prev
    cmid = ndf * nf_mult
    N, H, W = 2, 16, 16
    eps = 1e-5

    key = jax.random.PRNGKey(0)
    k1, k2, k3, k4, k5, k6, kx = jax.random.split(key, 7)

    # Conv1: PyTorch layout (Cout, Cin, kH, kW); bias=False (norm follows).
    w1_oihw = 0.05 * jax.random.normal(k1, (cmid, cin, 4, 4), jnp.float32)
    # BatchNorm2d(cmid) parameters (deterministic, non-trivial).
    gamma = 0.5 + jax.random.uniform(k2, (cmid,), jnp.float32)
    beta = 0.1 * jax.random.normal(k3, (cmid,), jnp.float32)
    r_mean = 0.1 * jax.random.normal(k4, (cmid,), jnp.float32)
    r_var = 0.5 + jax.random.uniform(k5, (cmid,), jnp.float32)
    # Conv2: (1, Cmid, 4, 4) with bias.
    w2_oihw = 0.05 * jax.random.normal(k6, (1, cmid, 4, 4), jnp.float32)
    b2 = jnp.array([0.03], jnp.float32)

    # Input in PyTorch NCHW layout.
    x = jax.random.normal(kx, (N, cin, H, W), jnp.float32)

    out = discriminator_tail_forward(x, w1_oihw, gamma, beta, r_mean, r_var,
                                     eps, w2_oihw, b2)
    out = jax.block_until_ready(out)

    # k=4, s=1, p=2 => spatial grows by 1 per conv: 16 -> 17 -> 18
    assert out.shape == (N, 1, H + 2, W + 2), out.shape

    ref = _reference(x, w1_oihw, gamma, beta, r_mean, r_var, eps, w2_oihw, b2)
    assert jnp.allclose(out, ref, atol=1e-3, rtol=1e-3), \
        float(jnp.max(jnp.abs(out - ref)))

    print("KERNEL_OK")
</pallas_src>

<mosaic_0001>
module attributes {stable_mosaic.version = 11 : i64} {
  func.func @kernel(%arg0: i32, %arg1: memref<1x4x256xf32, #tpu.memory_space<vmem>>, %arg2: memref<8x64xf32, #tpu.memory_space<vmem>>, %arg3: memref<8x1xf32, #tpu.memory_space<vmem>>, %arg4: memref<8x1xf32, #tpu.memory_space<vmem>>, %arg5: memref<1x128xf32, #tpu.memory_space<vmem>>, %arg6: memref<1x1xf32, #tpu.memory_space<vmem>>, %arg7: memref<1x1x324xf32, #tpu.memory_space<vmem>>, %arg8: memref<4x400xf32, #tpu.memory_space<vmem>>, %arg9: memref<8x441xf32, #tpu.memory_space<vmem>>) attributes {dimension_semantics = [#tpu.dimension_semantics<parallel>], iteration_bounds = array<i64: 2>, scalar_prefetch = 0 : i64, scratch_operands = 2 : i64, tpu.core_type = #tpu.core_type<tc>, window_params = [{transform_indices = @transform_0, window_bounds = array<i64: 1, 4, 256>}, {pipeline_mode = #tpu.pipeline_mode<synchronous>, transform_indices = @transform_1, window_bounds = array<i64: 8, 64>}, {pipeline_mode = #tpu.pipeline_mode<synchronous>, transform_indices = @transform_2, window_bounds = array<i64: 8, 1>}, {pipeline_mode = #tpu.pipeline_mode<synchronous>, transform_indices = @transform_3, window_bounds = array<i64: 8, 1>}, {pipeline_mode = #tpu.pipeline_mode<synchronous>, transform_indices = @transform_4, window_bounds = array<i64: 1, 128>}, {pipeline_mode = #tpu.pipeline_mode<synchronous>, transform_indices = @transform_5, window_bounds = array<i64: 1, 1>}, {transform_indices = @transform_6, window_bounds = array<i64: 1, 1, 324>}]} {
    %cst = arith.constant 0.000000e+00 : f32
    %0 = vector.broadcast %cst : f32 to vector<4x400xf32>
    %c0 = arith.constant 0 : index
    %c0_0 = arith.constant 0 : index
    %1 = vector.load %arg8[%c0, %c0_0] : memref<4x400xf32, #tpu.memory_space<vmem>>, vector<4x400xf32>
    tpu.vector_store %arg8[%c0, %c0_0], %0 {strides = array<i32>} : memref<4x400xf32, #tpu.memory_space<vmem>>, vector<4x400xf32>,
    %c0_1 = arith.constant 0 : index
    %c0_2 = arith.constant 0 : index
    %c0_3 = arith.constant 0 : index
    %2 = vector.load %arg1[%c0_1, %c0_2, %c0_3] : memref<1x4x256xf32, #tpu.memory_space<vmem>>, vector<1x4x16xf32>
    %3 = vector.shape_cast %2 : vector<1x4x16xf32> to vector<4x16xf32>
    %c0_4 = arith.constant 0 : index
    %c42 = arith.constant 42 : index
    %4 = vector.load %arg8[%c0_4, %c42] : memref<4x400xf32, #tpu.memory_space<vmem>>, vector<4x16xf32>
    tpu.vector_store %arg8[%c0_4, %c42], %3 {strides = array<i32>} : memref<4x400xf32, #tpu.memory_space<vmem>>, vector<4x16xf32>,
    %c0_5 = arith.constant 0 : index
    %c0_6 = arith.constant 0 : index
    %c16 = arith.constant 16 : index
    %5 = vector.load %arg1[%c0_5, %c0_6, %c16] : memref<1x4x256xf32, #tpu.memory_space<vmem>>, vector<1x4x16xf32>
    %6 = vector.shape_cast %5 : vector<1x4x16xf32> to vector<4x16xf32>
    %c0_7 = arith.constant 0 : index
    %c62 = arith.constant 62 : index
    %7 = vector.load %arg8[%c0_7, %c62] : memref<4x400xf32, #tpu.memory_space<vmem>>, vector<4x16xf32>
    tpu.vector_store %arg8[%c0_7, %c62], %6 {strides = array<i32>} : memref<4x400xf32, #tpu.memory_space<vmem>>, vector<4x16xf32>,
    %c0_8 = arith.constant 0 : index
    %c0_9 = arith.constant 0 : index
    %c32 = arith.constant 32 : index
    %8 = vector.load %arg1[%c0_8, %c0_9, %c32] : memref<1x4x256xf32, #tpu.memory_space<vmem>>, vector<1x4x16xf32>
    %9 = vector.shape_cast %8 : vector<1x4x16xf32> to vector<4x16xf32>
    %c0_10 = arith.constant 0 : index
    %c82 = arith.constant 82 : index
    %10 = vector.load %arg8[%c0_10, %c82] : memref<4x400xf32, #tpu.memory_space<vmem>>, vector<4x16xf32>
    tpu.vector_store %arg8[%c0_10, %c82], %9 {strides = array<i32>} : memref<4x400xf32, #tpu.memory_space<vmem>>, vector<4x16xf32>,
    %c0_11 = arith.constant 0 : index
    %c0_12 = arith.constant 0 : index
    %c48 = arith.constant 48 : index
    %11 = vector.load %arg1[%c0_11, %c0_12, %c48] : memref<1x4x256xf32, #tpu.memory_space<vmem>>, vector<1x4x16xf32>
    %12 = vector.shape_cast %11 : vector<1x4x16xf32> to vector<4x16xf32>
    %c0_13 = arith.constant 0 : index
    %c102 = arith.constant 102 : index
    %13 = vector.load %arg8[%c0_13, %c102] : memref<4x400xf32, #tpu.memory_space<vmem>>, vector<4x16xf32>
    tpu.vector_store %arg8[%c0_13, %c102], %12 {strides = array<i32>} : memref<4x400xf32, #tpu.memory_space<vmem>>, vector<4x16xf32>,
    %c0_14 = arith.constant 0 : index
    %c0_15 = arith.constant 0 : index
    %c64 = arith.constant 64 : index
    %14 = vector.load %arg1[%c0_14, %c0_15, %c64] : memref<1x4x256xf32, #tpu.memory_space<vmem>>, vector<1x4x16xf32>
    %15 = vector.shape_cast %14 : vector<1x4x16xf32> to vector<4x16xf32>
    %c0_16 = arith.constant 0 : index
    %c122 = arith.constant 122 : index
    %16 = vector.load %arg8[%c0_16, %c122] : memref<4x400xf32, #tpu.memory_space<vmem>>, vector<4x16xf32>
    tpu.vector_store %arg8[%c0_16, %c122], %15 {strides = array<i32>} : memref<4x400xf32, #tpu.memory_space<vmem>>, vector<4x16xf32>,
    %c0_17 = arith.constant 0 : index
    %c0_18 = arith.constant 0 : index
    %c80 = arith.constant 80 : index
    %17 = vector.load %arg1[%c0_17, %c0_18, %c80] : memref<1x4x256xf32, #tpu.memory_space<vmem>>, vector<1x4x16xf32>
    %18 = vector.shape_cast %17 : vector<1x4x16xf32> to vector<4x16xf32>
    %c0_19 = arith.constant 0 : index
    %c142 = arith.constant 142 : index
    %19 = vector.load %arg8[%c0_19, %c142] : memref<4x400xf32, #tpu.memory_space<vmem>>, vector<4x16xf32>
    tpu.vector_store %arg8[%c0_19, %c142], %18 {strides = array<i32>} : memref<4x400xf32, #tpu.memory_space<vmem>>, vector<4x16xf32>,
    %c0_20 = arith.constant 0 : index
    %c0_21 = arith.constant 0 : index
    %c96 = arith.constant 96 : index
    %20 = vector.load %arg1[%c0_20, %c0_21, %c96] : memref<1x4x256xf32, #tpu.memory_space<vmem>>, vector<1x4x16xf32>
    %21 = vector.shape_cast %20 : vector<1x4x16xf32> to vector<4x16xf32>
    %c0_22 = arith.constant 0 : index
    %c162 = arith.constant 162 : index
    %22 = vector.load %arg8[%c0_22, %c162] : memref<4x400xf32, #tpu.memory_space<vmem>>, vector<4x16xf32>
    tpu.vector_store %arg8[%c0_22, %c162], %21 {strides = array<i32>} : memref<4x400xf32, #tpu.memory_space<vmem>>, vector<4x16xf32>,
    %c0_23 = arith.constant 0 : index
    %c0_24 = arith.constant 0 : index
    %c112 = arith.constant 112 : index
    %23 = vector.load %arg1[%c0_23, %c0_24, %c112] : memref<1x4x256xf32, #tpu.memory_space<vmem>>, vector<1x4x16xf32>
    %24 = vector.shape_cast %23 : vector<1x4x16xf32> to vector<4x16xf32>
    %c0_25 = arith.constant 0 : index
    %c182 = arith.constant 182 : index
    %25 = vector.load %arg8[%c0_25, %c182] : memref<4x400xf32, #tpu.memory_space<vmem>>, vector<4x16xf32>
    tpu.vector_store %arg8[%c0_25, %c182], %24 {strides = array<i32>} : memref<4x400xf32, #tpu.memory_space<vmem>>, vector<4x16xf32>,
    %c0_26 = arith.constant 0 : index
    %c0_27 = arith.constant 0 : index
    %c128 = arith.constant 128 : index
    %26 = vector.load %arg1[%c0_26, %c0_27, %c128] : memref<1x4x256xf32, #tpu.memory_space<vmem>>, vector<1x4x16xf32>
    %27 = vector.shape_cast %26 : vector<1x4x16xf32> to vector<4x16xf32>
    %c0_28 = arith.constant 0 : index
    %c202 = arith.constant 202 : index
    %28 = vector.load %arg8[%c0_28, %c202] : memref<4x400xf32, #tpu.memory_space<vmem>>, vector<4x16xf32>
    tpu.vector_store %arg8[%c0_28, %c202], %27 {strides = array<i32>} : memref<4x400xf32, #tpu.memory_space<vmem>>, vector<4x16xf32>,
    %c0_29 = arith.constant 0 : index
    %c0_30 = arith.constant 0 : index
    %c144 = arith.constant 144 : index
    %29 = vector.load %arg1[%c0_29, %c0_30, %c144] : memref<1x4x256xf32, #tpu.memory_space<vmem>>, vector<1x4x16xf32>
    %30 = vector.shape_cast %29 : vector<1x4x16xf32> to vector<4x16xf32>
    %c0_31 = arith.constant 0 : index
    %c222 = arith.constant 222 : index
    %31 = vector.load %arg8[%c0_31, %c222] : memref<4x400xf32, #tpu.memory_space<vmem>>, vector<4x16xf32>
    tpu.vector_store %arg8[%c0_31, %c222], %30 {strides = array<i32>} : memref<4x400xf32, #tpu.memory_space<vmem>>, vector<4x16xf32>,
    %c0_32 = arith.constant 0 : index
    %c0_33 = arith.constant 0 : index
    %c160 = arith.constant 160 : index
    %32 = vector.load %arg1[%c0_32, %c0_33, %c160] : memref<1x4x256xf32, #tpu.memory_space<vmem>>, vector<1x4x16xf32>
    %33 = vector.shape_cast %32 : vector<1x4x16xf32> to vector<4x16xf32>
    %c0_34 = arith.constant 0 : index
    %c242 = arith.constant 242 : index
    %34 = vector.load %arg8[%c0_34, %c242] : memref<4x400xf32, #tpu.memory_space<vmem>>, vector<4x16xf32>
    tpu.vector_store %arg8[%c0_34, %c242], %33 {strides = array<i32>} : memref<4x400xf32, #tpu.memory_space<vmem>>, vector<4x16xf32>,
    %c0_35 = arith.constant 0 : index
    %c0_36 = arith.constant 0 : index
    %c176 = arith.constant 176 : index
    %35 = vector.load %arg1[%c0_35, %c0_36, %c176] : memref<1x4x256xf32, #tpu.memory_space<vmem>>, vector<1x4x16xf32>
    %36 = vector.shape_cast %35 : vector<1x4x16xf32> to vector<4x16xf32>
    %c0_37 = arith.constant 0 : index
    %c262 = arith.constant 262 : index
    %37 = vector.load %arg8[%c0_37, %c262] : memref<4x400xf32, #tpu.memory_space<vmem>>, vector<4x16xf32>
    tpu.vector_store %arg8[%c0_37, %c262], %36 {strides = array<i32>} : memref<4x400xf32, #tpu.memory_space<vmem>>, vector<4x16xf32>,
    %c0_38 = arith.constant 0 : index
    %c0_39 = arith.constant 0 : index
    %c192 = arith.constant 192 : index
    %38 = vector.load %arg1[%c0_38, %c0_39, %c192] : memref<1x4x256xf32, #tpu.memory_space<vmem>>, vector<1x4x16xf32>
    %39 = vector.shape_cast %38 : vector<1x4x16xf32> to vector<4x16xf32>
    %c0_40 = arith.constant 0 : index
    %c282 = arith.constant 282 : index
    %40 = vector.load %arg8[%c0_40, %c282] : memref<4x400xf32, #tpu.memory_space<vmem>>, vector<4x16xf32>
    tpu.vector_store %arg8[%c0_40, %c282], %39 {strides = array<i32>} : memref<4x400xf32, #tpu.memory_space<vmem>>, vector<4x16xf32>,
    %c0_41 = arith.constant 0 : index
    %c0_42 = arith.constant 0 : index
    %c208 = arith.constant 208 : index
    %41 = vector.load %arg1[%c0_41, %c0_42, %c208] : memref<1x4x256xf32, #tpu.memory_space<vmem>>, vector<1x4x16xf32>
    %42 = vector.shape_cast %41 : vector<1x4x16xf32> to vector<4x16xf32>
    %c0_43 = arith.constant 0 : index
    %c302 = arith.constant 302 : index
    %43 = vector.load %arg8[%c0_43, %c302] : memref<4x400xf32, #tpu.memory_space<vmem>>, vector<4x16xf32>
    tpu.vector_store %arg8[%c0_43, %c302], %42 {strides = array<i32>} : memref<4x400xf32, #tpu.memory_space<vmem>>, vector<4x16xf32>,
    %c0_44 = arith.constant 0 : index
    %c0_45 = arith.constant 0 : index
    %c224 = arith.constant 224 : index
    %44 = vector.load %arg1[%c0_44, %c0_45, %c224] : memref<1x4x256xf32, #tpu.memory_space<vmem>>, vector<1x4x16xf32>
    %45 = vector.shape_cast %44 : vector<1x4x16xf32> to vector<4x16xf32>
    %c0_46 = arith.constant 0 : index
    %c322 = arith.constant 322 : index
    %46 = vector.load %arg8[%c0_46, %c322] : memref<4x400xf32, #tpu.memory_space<vmem>>, vector<4x16xf32>
    tpu.vector_store %arg8[%c0_46, %c322], %45 {strides = array<i32>} : memref<4x400xf32, #tpu.memory_space<vmem>>, vector<4x16xf32>,
    %c0_47 = arith.constant 0 : index
    %c0_48 = arith.constant 0 : index
    %c240 = arith.constant 240 : index
    %47 = vector.load %arg1[%c0_47, %c0_48, %c240] : memref<1x4x256xf32, #tpu.memory_space<vmem>>, vector<1x4x16xf32>
    %48 = vector.shape_cast %47 : vector<1x4x16xf32> to vector<4x16xf32>
    %c0_49 = arith.constant 0 : index
    %c342 = arith.constant 342 : index
    %49 = vector.load %arg8[%c0_49, %c342] : memref<4x400xf32, #tpu.memory_space<vmem>>, vector<4x16xf32>
    tpu.vector_store %arg8[%c0_49, %c342], %48 {strides = array<i32>} : memref<4x400xf32, #tpu.memory_space<vmem>>, vector<4x16xf32>,
    %c0_50 = arith.constant 0 : index
    %c0_51 = arith.constant 0 : index
    %50 = vector.load %arg8[%c0_50, %c0_51] : memref<4x400xf32, #tpu.memory_space<vmem>>, vector<4x400xf32>
    %51 = vector.extract_strided_slice %50 {offsets = [0, 0], sizes = [4, 337], strides = [1, 1]} : vector<4x400xf32> to vector<4x337xf32>
    %52 = vector.extract_strided_slice %50 {offsets = [0, 1], sizes = [4, 337], strides = [1, 1]} : vector<4x400xf32> to vector<4x337xf32>
    %53 = vector.extract_strided_slice %50 {offsets = [0, 2], sizes = [4, 337], strides = [1, 1]} : vector<4x400xf32> to vector<4x337xf32>
    %54 = vector.extract_strided_slice %50 {offsets = [0, 3], sizes = [4, 337], strides = [1, 1]} : vector<4x400xf32> to vector<4x337xf32>
    %55 = vector.extract_strided_slice %50 {offsets = [0, 20], sizes = [4, 337], strides = [1, 1]} : vector<4x400xf32> to vector<4x337xf32>
    %56 = vector.extract_strided_slice %50 {offsets = [0, 21], sizes = [4, 337], strides = [1, 1]} : vector<4x400xf32> to vector<4x337xf32>
    %57 = vector.extract_strided_slice %50 {offsets = [0, 22], sizes = [4, 337], strides = [1, 1]} : vector<4x400xf32> to vector<4x337xf32>
    %58 = vector.extract_strided_slice %50 {offsets = [0, 23], sizes = [4, 337], strides = [1, 1]} : vector<4x400xf32> to vector<4x337xf32>
    %59 = vector.extract_strided_slice %50 {offsets = [0, 40], sizes = [4, 337], strides = [1, 1]} : vector<4x400xf32> to vector<4x337xf32>
    %60 = vector.extract_strided_slice %50 {offsets = [0, 41], sizes = [4, 337], strides = [1, 1]} : vector<4x400xf32> to vector<4x337xf32>
    %61 = vector.extract_strided_slice %50 {offsets = [0, 42], sizes = [4, 337], strides = [1, 1]} : vector<4x400xf32> to vector<4x337xf32>
    %62 = vector.extract_strided_slice %50 {offsets = [0, 43], sizes = [4, 337], strides = [1, 1]} : vector<4x400xf32> to vector<4x337xf32>
    %63 = vector.extract_strided_slice %50 {offsets = [0, 60], sizes = [4, 337], strides = [1, 1]} : vector<4x400xf32> to vector<4x337xf32>
    %64 = vector.extract_strided_slice %50 {offsets = [0, 61], sizes = [4, 337], strides = [1, 1]} : vector<4x400xf32> to vector<4x337xf32>
    %65 = vector.extract_strided_slice %50 {offsets = [0, 62], sizes = [4, 337], strides = [1, 1]} : vector<4x400xf32> to vector<4x337xf32>
    %66 = vector.extract_strided_slice %50 {offsets = [0, 63], sizes = [4, 337], strides = [1, 1]} : vector<4x400xf32> to vector<4x337xf32>
    %67 = tpu.concatenate %51, %52, %53, %54, %55, %56, %57, %58, %59, %60, %61, %62, %63, %64, %65, %66 in 0 : vector<4x337xf32>, vector<4x337xf32>, vector<4x337xf32>, vector<4x337xf32>, vector<4x337xf32>, vector<4x337xf32>, vector<4x337xf32>, vector<4x337xf32>, vector<4x337xf32>, vector<4x337xf32>, vector<4x337xf32>, vector<4x337xf32>, vector<4x337xf32>, vector<4x337xf32>, vector<4x337xf32>, vector<4x337xf32> -> vector<64x337xf32>
    %c0_52 = arith.constant 0 : index
    %c0_53 = arith.constant 0 : index
    %68 = vector.load %arg2[%c0_52, %c0_53] : memref<8x64xf32, #tpu.memory_space<vmem>>, vector<8x64xf32>
    %cst_54 = arith.constant dense<0.000000e+00> : vector<8x337xf32>
    %69 = tpu.matmul %68, %67, %cst_54 {dimension_numbers = #tpu.dot_dimension_numbers<[1], [0], [0], [1], [0, 0, 1, 1], [], []>} : vector<8x64xf32>, vector<64x337xf32>, vector<8x337xf32> -> vector<8x337xf32>
    %c0_55 = arith.constant 0 : index
    %c0_56 = arith.constant 0 : index
    %70 = vector.load %arg3[%c0_55, %c0_56] : memref<8x1xf32, #tpu.memory_space<vmem>>, vector<8x1xf32>
    %71 = vector.broadcast %70 : vector<8x1xf32> to vector<8x337xf32>
    %72 = arith.mulf %69, %71 : vector<8x337xf32>
    %c0_57 = arith.constant 0 : index
    %c0_58 = arith.constant 0 : index
    %73 = vector.load %arg4[%c0_57, %c0_58] : memref<8x1xf32, #tpu.memory_space<vmem>>, vector<8x1xf32>
    %74 = vector.broadcast %73 : vector<8x1xf32> to vector<8x337xf32>
    %75 = arith.addf %72, %74 : vector<8x337xf32>
    %cst_59 = arith.constant 0.000000e+00 : f32
    %76 = vector.broadcast %cst_59 : f32 to vector<8x337xf32>
    %77 = arith.cmpf ogt, %75, %76 : vector<8x337xf32>
    %cst_60 = arith.constant 2.000000e-01 : f32
    %78 = vector.broadcast %cst_60 : f32 to vector<8x337xf32>
    %79 = arith.mulf %78, %75 : vector<8x337xf32>
    %80 = arith.select %77, %75, %79 : vector<8x337xi1>, vector<8x337xf32>
    %cst_61 = arith.constant 0.000000e+00 : f32
    %81 = vector.broadcast %cst_61 : f32 to vector<8x441xf32>
    %c0_62 = arith.constant 0 : index
    %c0_63 = arith.constant 0 : index
    %82 = vector.load %arg9[%c0_62, %c0_63] : memref<8x441xf32, #tpu.memory_space<vmem>>, vector<8x441xf32>
    tpu.vector_store %arg9[%c0_62, %c0_63], %81 {strides = array<i32>} : memref<8x441xf32, #tpu.memory_space<vmem>>, vector<8x441xf32>,
    %83 = vector.extract_strided_slice %80 {offsets = [0, 0], sizes = [8, 17], strides = [1, 1]} : vector<8x337xf32> to vector<8x17xf32>
    %c0_64 = arith.constant 0 : index
    %c44 = arith.constant 44 : index
    %84 = vector.load %arg9[%c0_64, %c44] : memref<8x441xf32, #tpu.memory_space<vmem>>, vector<8x17xf32>
    tpu.vector_store %arg9[%c0_64, %c44], %83 {strides = array<i32>} : memref<8x441xf32, #tpu.memory_space<vmem>>, vector<8x17xf32>,
    %85 = vector.extract_strided_slice %80 {offsets = [0, 20], sizes = [8, 17], strides = [1, 1]} : vector<8x337xf32> to vector<8x17xf32>
    %c0_65 = arith.constant 0 : index
    %c65 = arith.constant 65 : index
    %86 = vector.load %arg9[%c0_65, %c65] : memref<8x441xf32, #tpu.memory_space<vmem>>, vector<8x17xf32>
    tpu.vector_store %arg9[%c0_65, %c65], %85 {strides = array<i32>} : memref<8x441xf32, #tpu.memory_space<vmem>>, vector<8x17xf32>,
    %87 = vector.extract_strided_slice %80 {offsets = [0, 40], sizes = [8, 17], strides = [1, 1]} : vector<8x337xf32> to vector<8x17xf32>
    %c0_66 = arith.constant 0 : index
    %c86 = arith.constant 86 : index
    %88 = vector.load %arg9[%c0_66, %c86] : memref<8x441xf32, #tpu.memory_space<vmem>>, vector<8x17xf32>
    tpu.vector_store %arg9[%c0_66, %c86], %87 {strides = array<i32>} : memref<8x441xf32, #tpu.memory_space<vmem>>, vector<8x17xf32>,
    %89 = vector.extract_strided_slice %80 {offsets = [0, 60], sizes = [8, 17], strides = [1, 1]} : vector<8x337xf32> to vector<8x17xf32>
    %c0_67 = arith.constant 0 : index
    %c107 = arith.constant 107 : index
    %90 = vector.load %arg9[%c0_67, %c107] : memref<8x441xf32, #tpu.memory_space<vmem>>, vector<8x17xf32>
    tpu.vector_store %arg9[%c0_67, %c107], %89 {strides = array<i32>} : memref<8x441xf32, #tpu.memory_space<vmem>>, vector<8x17xf32>,
    %91 = vector.extract_strided_slice %80 {offsets = [0, 80], sizes = [8, 17], strides = [1, 1]} : vector<8x337xf32> to vector<8x17xf32>
    %c0_68 = arith.constant 0 : index
    %c128_69 = arith.constant 128 : index
    %92 = vector.load %arg9[%c0_68, %c128_69] : memref<8x441xf32, #tpu.memory_space<vmem>>, vector<8x17xf32>
    tpu.vector_store %arg9[%c0_68, %c128_69], %91 {strides = array<i32>} : memref<8x441xf32, #tpu.memory_space<vmem>>, vector<8x17xf32>,
    %93 = vector.extract_strided_slice %80 {offsets = [0, 100], sizes = [8, 17], strides = [1, 1]} : vector<8x337xf32> to vector<8x17xf32>
    %c0_70 = arith.constant 0 : index
    %c149 = arith.constant 149 : index
    %94 = vector.load %arg9[%c0_70, %c149] : memref<8x441xf32, #tpu.memory_space<vmem>>, vector<8x17xf32>
    tpu.vector_store %arg9[%c0_70, %c149], %93 {strides = array<i32>} : memref<8x441xf32, #tpu.memory_space<vmem>>, vector<8x17xf32>,
    %95 = vector.extract_strided_slice %80 {offsets = [0, 120], sizes = [8, 17], strides = [1, 1]} : vector<8x337xf32> to vector<8x17xf32>
    %c0_71 = arith.constant 0 : index
    %c170 = arith.constant 170 : index
    %96 = vector.load %arg9[%c0_71, %c170] : memref<8x441xf32, #tpu.memory_space<vmem>>, vector<8x17xf32>
    tpu.vector_store %arg9[%c0_71, %c170], %95 {strides = array<i32>} : memref<8x441xf32, #tpu.memory_space<vmem>>, vector<8x17xf32>,
    %97 = vector.extract_strided_slice %80 {offsets = [0, 140], sizes = [8, 17], strides = [1, 1]} : vector<8x337xf32> to vector<8x17xf32>
    %c0_72 = arith.constant 0 : index
    %c191 = arith.constant 191 : index
    %98 = vector.load %arg9[%c0_72, %c191] : memref<8x441xf32, #tpu.memory_space<vmem>>, vector<8x17xf32>
    tpu.vector_store %arg9[%c0_72, %c191], %97 {strides = array<i32>} : memref<8x441xf32, #tpu.memory_space<vmem>>, vector<8x17xf32>,
    %99 = vector.extract_strided_slice %80 {offsets = [0, 160], sizes = [8, 17], strides = [1, 1]} : vector<8x337xf32> to vector<8x17xf32>
    %c0_73 = arith.constant 0 : index
    %c212 = arith.constant 212 : index
    %100 = vector.load %arg9[%c0_73, %c212] : memref<8x441xf32, #tpu.memory_space<vmem>>, vector<8x17xf32>
    tpu.vector_store %arg9[%c0_73, %c212], %99 {strides = array<i32>} : memref<8x441xf32, #tpu.memory_space<vmem>>, vector<8x17xf32>,
    %101 = vector.extract_strided_slice %80 {offsets = [0, 180], sizes = [8, 17], strides = [1, 1]} : vector<8x337xf32> to vector<8x17xf32>
    %c0_74 = arith.constant 0 : index
    %c233 = arith.constant 233 : index
    %102 = vector.load %arg9[%c0_74, %c233] : memref<8x441xf32, #tpu.memory_space<vmem>>, vector<8x17xf32>
    tpu.vector_store %arg9[%c0_74, %c233], %101 {strides = array<i32>} : memref<8x441xf32, #tpu.memory_space<vmem>>, vector<8x17xf32>,
    %103 = vector.extract_strided_slice %80 {offsets = [0, 200], sizes = [8, 17], strides = [1, 1]} : vector<8x337xf32> to vector<8x17xf32>
    %c0_75 = arith.constant 0 : index
    %c254 = arith.constant 254 : index
    %104 = vector.load %arg9[%c0_75, %c254] : memref<8x441xf32, #tpu.memory_space<vmem>>, vector<8x17xf32>
    tpu.vector_store %arg9[%c0_75, %c254], %103 {strides = array<i32>} : memref<8x441xf32, #tpu.memory_space<vmem>>, vector<8x17xf32>,
    %105 = vector.extract_strided_slice %80 {offsets = [0, 220], sizes = [8, 17], strides = [1, 1]} : vector<8x337xf32> to vector<8x17xf32>
    %c0_76 = arith.constant 0 : index
    %c275 = arith.constant 275 : index
    %106 = vector.load %arg9[%c0_76, %c275] : memref<8x441xf32, #tpu.memory_space<vmem>>, vector<8x17xf32>
    tpu.vector_store %arg9[%c0_76, %c275], %105 {strides = array<i32>} : memref<8x441xf32, #tpu.memory_space<vmem>>, vector<8x17xf32>,
    %107 = vector.extract_strided_slice %80 {offsets = [0, 240], sizes = [8, 17], strides = [1, 1]} : vector<8x337xf32> to vector<8x17xf32>
    %c0_77 = arith.constant 0 : index
    %c296 = arith.constant 296 : index
    %108 = vector.load %arg9[%c0_77, %c296] : memref<8x441xf32, #tpu.memory_space<vmem>>, vector<8x17xf32>
    tpu.vector_store %arg9[%c0_77, %c296], %107 {strides = array<i32>} : memref<8x441xf32, #tpu.memory_space<vmem>>, vector<8x17xf32>,
    %109 = vector.extract_strided_slice %80 {offsets = [0, 260], sizes = [8, 17], strides = [1, 1]} : vector<8x337xf32> to vector<8x17xf32>
    %c0_78 = arith.constant 0 : index
    %c317 = arith.constant 317 : index
    %110 = vector.load %arg9[%c0_78, %c317] : memref<8x441xf32, #tpu.memory_space<vmem>>, vector<8x17xf32>
    tpu.vector_store %arg9[%c0_78, %c317], %109 {strides = array<i32>} : memref<8x441xf32, #tpu.memory_space<vmem>>, vector<8x17xf32>,
    %111 = vector.extract_strided_slice %80 {offsets = [0, 280], sizes = [8, 17], strides = [1, 1]} : vector<8x337xf32> to vector<8x17xf32>
    %c0_79 = arith.constant 0 : index
    %c338 = arith.constant 338 : index
    %112 = vector.load %arg9[%c0_79, %c338] : memref<8x441xf32, #tpu.memory_space<vmem>>, vector<8x17xf32>
    tpu.vector_store %arg9[%c0_79, %c338], %111 {strides = array<i32>} : memref<8x441xf32, #tpu.memory_space<vmem>>, vector<8x17xf32>,
    %113 = vector.extract_strided_slice %80 {offsets = [0, 300], sizes = [8, 17], strides = [1, 1]} : vector<8x337xf32> to vector<8x17xf32>
    %c0_80 = arith.constant 0 : index
    %c359 = arith.constant 359 : index
    %114 = vector.load %arg9[%c0_80, %c359] : memref<8x441xf32, #tpu.memory_space<vmem>>, vector<8x17xf32>
    tpu.vector_store %arg9[%c0_80, %c359], %113 {strides = array<i32>} : memref<8x441xf32, #tpu.memory_space<vmem>>, vector<8x17xf32>,
    %115 = vector.extract_strided_slice %80 {offsets = [0, 320], sizes = [8, 17], strides = [1, 1]} : vector<8x337xf32> to vector<8x17xf32>
    %c0_81 = arith.constant 0 : index
    %c380 = arith.constant 380 : index
    %116 = vector.load %arg9[%c0_81, %c380] : memref<8x441xf32, #tpu.memory_space<vmem>>, vector<8x17xf32>
    tpu.vector_store %arg9[%c0_81, %c380], %115 {strides = array<i32>} : memref<8x441xf32, #tpu.memory_space<vmem>>, vector<8x17xf32>,
    %c0_82 = arith.constant 0 : index
    %c0_83 = arith.constant 0 : index
    %117 = vector.load %arg9[%c0_82, %c0_83] : memref<8x441xf32, #tpu.memory_space<vmem>>, vector<8x441xf32>
    %118 = vector.extract_strided_slice %117 {offsets = [0, 0], sizes = [8, 375], strides = [1, 1]} : vector<8x441xf32> to vector<8x375xf32>
    %119 = vector.extract_strided_slice %117 {offsets = [0, 1], sizes = [8, 375], strides = [1, 1]} : vector<8x441xf32> to vector<8x375xf32>
    %120 = vector.extract_strided_slice %117 {offsets = [0, 2], sizes = [8, 375], strides = [1, 1]} : vector<8x441xf32> to vector<8x375xf32>
    %121 = vector.extract_strided_slice %117 {offsets = [0, 3], sizes = [8, 375], strides = [1, 1]} : vector<8x441xf32> to vector<8x375xf32>
    %122 = vector.extract_strided_slice %117 {offsets = [0, 21], sizes = [8, 375], strides = [1, 1]} : vector<8x441xf32> to vector<8x375xf32>
    %123 = vector.extract_strided_slice %117 {offsets = [0, 22], sizes = [8, 375], strides = [1, 1]} : vector<8x441xf32> to vector<8x375xf32>
    %124 = vector.extract_strided_slice %117 {offsets = [0, 23], sizes = [8, 375], strides = [1, 1]} : vector<8x441xf32> to vector<8x375xf32>
    %125 = vector.extract_strided_slice %117 {offsets = [0, 24], sizes = [8, 375], strides = [1, 1]} : vector<8x441xf32> to vector<8x375xf32>
    %126 = vector.extract_strided_slice %117 {offsets = [0, 42], sizes = [8, 375], strides = [1, 1]} : vector<8x441xf32> to vector<8x375xf32>
    %127 = vector.extract_strided_slice %117 {offsets = [0, 43], sizes = [8, 375], strides = [1, 1]} : vector<8x441xf32> to vector<8x375xf32>
    %128 = vector.extract_strided_slice %117 {offsets = [0, 44], sizes = [8, 375], strides = [1, 1]} : vector<8x441xf32> to vector<8x375xf32>
    %129 = vector.extract_strided_slice %117 {offsets = [0, 45], sizes = [8, 375], strides = [1, 1]} : vector<8x441xf32> to vector<8x375xf32>
    %130 = vector.extract_strided_slice %117 {offsets = [0, 63], sizes = [8, 375], strides = [1, 1]} : vector<8x441xf32> to vector<8x375xf32>
    %131 = vector.extract_strided_slice %117 {offsets = [0, 64], sizes = [8, 375], strides = [1, 1]} : vector<8x441xf32> to vector<8x375xf32>
    %132 = vector.extract_strided_slice %117 {offsets = [0, 65], sizes = [8, 375], strides = [1, 1]} : vector<8x441xf32> to vector<8x375xf32>
    %133 = vector.extract_strided_slice %117 {offsets = [0, 66], sizes = [8, 375], strides = [1, 1]} : vector<8x441xf32> to vector<8x375xf32>
    %134 = tpu.concatenate %118, %119, %120, %121, %122, %123, %124, %125, %126, %127, %128, %129, %130, %131, %132, %133 in 0 : vector<8x375xf32>, vector<8x375xf32>, vector<8x375xf32>, vector<8x375xf32>, vector<8x375xf32>, vector<8x375xf32>, vector<8x375xf32>, vector<8x375xf32>, vector<8x375xf32>, vector<8x375xf32>, vector<8x375xf32>, vector<8x375xf32>, vector<8x375xf32>, vector<8x375xf32>, vector<8x375xf32>, vector<8x375xf32> -> vector<128x375xf32>
    %c0_84 = arith.constant 0 : index
    %c0_85 = arith.constant 0 : index
    %135 = vector.load %arg5[%c0_84, %c0_85] : memref<1x128xf32, #tpu.memory_space<vmem>>, vector<1x128xf32>
    %cst_86 = arith.constant dense<0.000000e+00> : vector<1x375xf32>
    %136 = tpu.matmul %135, %134, %cst_86 {dimension_numbers = #tpu.dot_dimension_numbers<[1], [0], [0], [1], [0, 0, 1, 1], [], []>} : vector<1x128xf32>, vector<128x375xf32>, vector<1x375xf32> -> vector<1x375xf32>
    %c0_87 = arith.constant 0 : index
    %c0_88 = arith.constant 0 : index
    %137 = vector.load %arg6[%c0_87, %c0_88] : memref<1x1xf32, #tpu.memory_space<vmem>>, vector<1x1xf32>
    %138 = vector.broadcast %137 : vector<1x1xf32> to vector<1x375xf32>
    %139 = arith.addf %136, %138 : vector<1x375xf32>
    %140 = vector.extract_strided_slice %139 {offsets = [0, 0], sizes = [1, 18], strides = [1, 1]} : vector<1x375xf32> to vector<1x18xf32>
    %c0_89 = arith.constant 0 : index
    %c0_90 = arith.constant 0 : index
    %c0_91 = arith.constant 0 : index
    %141 = vector.load %arg7[%c0_89, %c0_90, %c0_91] : memref<1x1x324xf32, #tpu.memory_space<vmem>>, vector<1x1x18xf32>
    %142 = vector.shape_cast %141 : vector<1x1x18xf32> to vector<1x18xf32>
    %143 = vector.shape_cast %140 : vector<1x18xf32> to vector<1x1x18xf32>
    tpu.vector_store %arg7[%c0_89, %c0_90, %c0_91], %143 {strides = array<i32>} : memref<1x1x324xf32, #tpu.memory_space<vmem>>, vector<1x1x18xf32>,
    %144 = vector.extract_strided_slice %139 {offsets = [0, 21], sizes = [1, 18], strides = [1, 1]} : vector<1x375xf32> to vector<1x18xf32>
    %c0_92 = arith.constant 0 : index
    %c0_93 = arith.constant 0 : index
    %c18 = arith.constant 18 : index
    %145 = vector.load %arg7[%c0_92, %c0_93, %c18] : memref<1x1x324xf32, #tpu.memory_space<vmem>>, vector<1x1x18xf32>
    %146 = vector.shape_cast %145 : vector<1x1x18xf32> to vector<1x18xf32>
    %147 = vector.shape_cast %144 : vector<1x18xf32> to vector<1x1x18xf32>
    tpu.vector_store %arg7[%c0_92, %c0_93, %c18], %147 {strides = array<i32>} : memref<1x1x324xf32, #tpu.memory_space<vmem>>, vector<1x1x18xf32>,
    %148 = vector.extract_strided_slice %139 {offsets = [0, 42], sizes = [1, 18], strides = [1, 1]} : vector<1x375xf32> to vector<1x18xf32>
    %c0_94 = arith.constant 0 : index
    %c0_95 = arith.constant 0 : index
    %c36 = arith.constant 36 : index
    %149 = vector.load %arg7[%c0_94, %c0_95, %c36] : memref<1x1x324xf32, #tpu.memory_space<vmem>>, vector<1x1x18xf32>
    %150 = vector.shape_cast %149 : vector<1x1x18xf32> to vector<1x18xf32>
    %151 = vector.shape_cast %148 : vector<1x18xf32> to vector<1x1x18xf32>
    tpu.vector_store %arg7[%c0_94, %c0_95, %c36], %151 {strides = array<i32>} : memref<1x1x324xf32, #tpu.memory_space<vmem>>, vector<1x1x18xf32>,
    %152 = vector.extract_strided_slice %139 {offsets = [0, 63], sizes = [1, 18], strides = [1, 1]} : vector<1x375xf32> to vector<1x18xf32>
    %c0_96 = arith.constant 0 : index
    %c0_97 = arith.constant 0 : index
    %c54 = arith.constant 54 : index
    %153 = vector.load %arg7[%c0_96, %c0_97, %c54] : memref<1x1x324xf32, #tpu.memory_space<vmem>>, vector<1x1x18xf32>
    %154 = vector.shape_cast %153 : vector<1x1x18xf32> to vector<1x18xf32>
    %155 = vector.shape_cast %152 : vector<1x18xf32> to vector<1x1x18xf32>
    tpu.vector_store %arg7[%c0_96, %c0_97, %c54], %155 {strides = array<i32>} : memref<1x1x324xf32, #tpu.memory_space<vmem>>, vector<1x1x18xf32>,
    %156 = vector.extract_strided_slice %139 {offsets = [0, 84], sizes = [1, 18], strides = [1, 1]} : vector<1x375xf32> to vector<1x18xf32>
    %c0_98 = arith.constant 0 : index
    %c0_99 = arith.constant 0 : index
    %c72 = arith.constant 72 : index
    %157 = vector.load %arg7[%c0_98, %c0_99, %c72] : memref<1x1x324xf32, #tpu.memory_space<vmem>>, vector<1x1x18xf32>
    %158 = vector.shape_cast %157 : vector<1x1x18xf32> to vector<1x18xf32>
    %159 = vector.shape_cast %156 : vector<1x18xf32> to vector<1x1x18xf32>
    tpu.vector_store %arg7[%c0_98, %c0_99, %c72], %159 {strides = array<i32>} : memref<1x1x324xf32, #tpu.memory_space<vmem>>, vector<1x1x18xf32>,
    %160 = vector.extract_strided_slice %139 {offsets = [0, 105], sizes = [1, 18], strides = [1, 1]} : vector<1x375xf32> to vector<1x18xf32>
    %c0_100 = arith.constant 0 : index
    %c0_101 = arith.constant 0 : index
    %c90 = arith.constant 90 : index
    %161 = vector.load %arg7[%c0_100, %c0_101, %c90] : memref<1x1x324xf32, #tpu.memory_space<vmem>>, vector<1x1x18xf32>
    %162 = vector.shape_cast %161 : vector<1x1x18xf32> to vector<1x18xf32>
    %163 = vector.shape_cast %160 : vector<1x18xf32> to vector<1x1x18xf32>
    tpu.vector_store %arg7[%c0_100, %c0_101, %c90], %163 {strides = array<i32>} : memref<1x1x324xf32, #tpu.memory_space<vmem>>, vector<1x1x18xf32>,
    %164 = vector.extract_strided_slice %139 {offsets = [0, 126], sizes = [1, 18], strides = [1, 1]} : vector<1x375xf32> to vector<1x18xf32>
    %c0_102 = arith.constant 0 : index
    %c0_103 = arith.constant 0 : index
    %c108 = arith.constant 108 : index
    %165 = vector.load %arg7[%c0_102, %c0_103, %c108] : memref<1x1x324xf32, #tpu.memory_space<vmem>>, vector<1x1x18xf32>
    %166 = vector.shape_cast %165 : vector<1x1x18xf32> to vector<1x18xf32>
    %167 = vector.shape_cast %164 : vector<1x18xf32> to vector<1x1x18xf32>
    tpu.vector_store %arg7[%c0_102, %c0_103, %c108], %167 {strides = array<i32>} : memref<1x1x324xf32, #tpu.memory_space<vmem>>, vector<1x1x18xf32>,
    %168 = vector.extract_strided_slice %139 {offsets = [0, 147], sizes = [1, 18], strides = [1, 1]} : vector<1x375xf32> to vector<1x18xf32>
    %c0_104 = arith.constant 0 : index
    %c0_105 = arith.constant 0 : index
    %c126 = arith.constant 126 : index
    %169 = vector.load %arg7[%c0_104, %c0_105, %c126] : memref<1x1x324xf32, #tpu.memory_space<vmem>>, vector<1x1x18xf32>
    %170 = vector.shape_cast %169 : vector<1x1x18xf32> to vector<1x18xf32>
    %171 = vector.shape_cast %168 : vector<1x18xf32> to vector<1x1x18xf32>
    tpu.vector_store %arg7[%c0_104, %c0_105, %c126], %171 {strides = array<i32>} : memref<1x1x324xf32, #tpu.memory_space<vmem>>, vector<1x1x18xf32>,
    %172 = vector.extract_strided_slice %139 {offsets = [0, 168], sizes = [1, 18], strides = [1, 1]} : vector<1x375xf32> to vector<1x18xf32>
    %c0_106 = arith.constant 0 : index
    %c0_107 = arith.constant 0 : index
    %c144_108 = arith.constant 144 : index
    %173 = vector.load %arg7[%c0_106, %c0_107, %c144_108] : memref<1x1x324xf32, #tpu.memory_space<vmem>>, vector<1x1x18xf32>
    %174 = vector.shape_cast %173 : vector<1x1x18xf32> to vector<1x18xf32>
    %175 = vector.shape_cast %172 : vector<1x18xf32> to vector<1x1x18xf32>
    tpu.vector_store %arg7[%c0_106, %c0_107, %c144_108], %175 {strides = array<i32>} : memref<1x1x324xf32, #tpu.memory_space<vmem>>, vector<1x1x18xf32>,
    %176 = vector.extract_strided_slice %139 {offsets = [0, 189], sizes = [1, 18], strides = [1, 1]} : vector<1x375xf32> to vector<1x18xf32>
    %c0_109 = arith.constant 0 : index
    %c0_110 = arith.constant 0 : index
    %c162_111 = arith.constant 162 : index
    %177 = vector.load %arg7[%c0_109, %c0_110, %c162_111] : memref<1x1x324xf32, #tpu.memory_space<vmem>>, vector<1x1x18xf32>
    %178 = vector.shape_cast %177 : vector<1x1x18xf32> to vector<1x18xf32>
    %179 = vector.shape_cast %176 : vector<1x18xf32> to vector<1x1x18xf32>
    tpu.vector_store %arg7[%c0_109, %c0_110, %c162_111], %179 {strides = array<i32>} : memref<1x1x324xf32, #tpu.memory_space<vmem>>, vector<1x1x18xf32>,
    %180 = vector.extract_strided_slice %139 {offsets = [0, 210], sizes = [1, 18], strides = [1, 1]} : vector<1x375xf32> to vector<1x18xf32>
    %c0_112 = arith.constant 0 : index
    %c0_113 = arith.constant 0 : index
    %c180 = arith.constant 180 : index
    %181 = vector.load %arg7[%c0_112, %c0_113, %c180] : memref<1x1x324xf32, #tpu.memory_space<vmem>>, vector<1x1x18xf32>
    %182 = vector.shape_cast %181 : vector<1x1x18xf32> to vector<1x18xf32>
    %183 = vector.shape_cast %180 : vector<1x18xf32> to vector<1x1x18xf32>
    tpu.vector_store %arg7[%c0_112, %c0_113, %c180], %183 {strides = array<i32>} : memref<1x1x324xf32, #tpu.memory_space<vmem>>, vector<1x1x18xf32>,
    %184 = vector.extract_strided_slice %139 {offsets = [0, 231], sizes = [1, 18], strides = [1, 1]} : vector<1x375xf32> to vector<1x18xf32>
    %c0_114 = arith.constant 0 : index
    %c0_115 = arith.constant 0 : index
    %c198 = arith.constant 198 : index
    %185 = vector.load %arg7[%c0_114, %c0_115, %c198] : memref<1x1x324xf32, #tpu.memory_space<vmem>>, vector<1x1x18xf32>
    %186 = vector.shape_cast %185 : vector<1x1x18xf32> to vector<1x18xf32>
    %187 = vector.shape_cast %184 : vector<1x18xf32> to vector<1x1x18xf32>
    tpu.vector_store %arg7[%c0_114, %c0_115, %c198], %187 {strides = array<i32>} : memref<1x1x324xf32, #tpu.memory_space<vmem>>, vector<1x1x18xf32>,
    %188 = vector.extract_strided_slice %139 {offsets = [0, 252], sizes = [1, 18], strides = [1, 1]} : vector<1x375xf32> to vector<1x18xf32>
    %c0_116 = arith.constant 0 : index
    %c0_117 = arith.constant 0 : index
    %c216 = arith.constant 216 : index
    %189 = vector.load %arg7[%c0_116, %c0_117, %c216] : memref<1x1x324xf32, #tpu.memory_space<vmem>>, vector<1x1x18xf32>
    %190 = vector.shape_cast %189 : vector<1x1x18xf32> to vector<1x18xf32>
    %191 = vector.shape_cast %188 : vector<1x18xf32> to vector<1x1x18xf32>
    tpu.vector_store %arg7[%c0_116, %c0_117, %c216], %191 {strides = array<i32>} : memref<1x1x324xf32, #tpu.memory_space<vmem>>, vector<1x1x18xf32>,
    %192 = vector.extract_strided_slice %139 {offsets = [0, 273], sizes = [1, 18], strides = [1, 1]} : vector<1x375xf32> to vector<1x18xf32>
    %c0_118 = arith.constant 0 : index
    %c0_119 = arith.constant 0 : index
    %c234 = arith.constant 234 : index
    %193 = vector.load %arg7[%c0_118, %c0_119, %c234] : memref<1x1x324xf32, #tpu.memory_space<vmem>>, vector<1x1x18xf32>
    %194 = vector.shape_cast %193 : vector<1x1x18xf32> to vector<1x18xf32>
    %195 = vector.shape_cast %192 : vector<1x18xf32> to vector<1x1x18xf32>
    tpu.vector_store %arg7[%c0_118, %c0_119, %c234], %195 {strides = array<i32>} : memref<1x1x324xf32, #tpu.memory_space<vmem>>, vector<1x1x18xf32>,
    %196 = vector.extract_strided_slice %139 {offsets = [0, 294], sizes = [1, 18], strides = [1, 1]} : vector<1x375xf32> to vector<1x18xf32>
    %c0_120 = arith.constant 0 : index
    %c0_121 = arith.constant 0 : index
    %c252 = arith.constant 252 : index
    %197 = vector.load %arg7[%c0_120, %c0_121, %c252] : memref<1x1x324xf32, #tpu.memory_space<vmem>>, vector<1x1x18xf32>
    %198 = vector.shape_cast %197 : vector<1x1x18xf32> to vector<1x18xf32>
    %199 = vector.shape_cast %196 : vector<1x18xf32> to vector<1x1x18xf32>
    tpu.vector_store %arg7[%c0_120, %c0_121, %c252], %199 {strides = array<i32>} : memref<1x1x324xf32, #tpu.memory_space<vmem>>, vector<1x1x18xf32>,
    %200 = vector.extract_strided_slice %139 {offsets = [0, 315], sizes = [1, 18], strides = [1, 1]} : vector<1x375xf32> to vector<1x18xf32>
    %c0_122 = arith.constant 0 : index
    %c0_123 = arith.constant 0 : index
    %c270 = arith.constant 270 : index
    %201 = vector.load %arg7[%c0_122, %c0_123, %c270] : memref<1x1x324xf32, #tpu.memory_space<vmem>>, vector<1x1x18xf32>
    %202 = vector.shape_cast %201 : vector<1x1x18xf32> to vector<1x18xf32>
    %203 = vector.shape_cast %200 : vector<1x18xf32> to vector<1x1x18xf32>
    tpu.vector_store %arg7[%c0_122, %c0_123, %c270], %203 {strides = array<i32>} : memref<1x1x324xf32, #tpu.memory_space<vmem>>, vector<1x1x18xf32>,
    %204 = vector.extract_strided_slice %139 {offsets = [0, 336], sizes = [1, 18], strides = [1, 1]} : vector<1x375xf32> to vector<1x18xf32>
    %c0_124 = arith.constant 0 : index
    %c0_125 = arith.constant 0 : index
    %c288 = arith.constant 288 : index
    %205 = vector.load %arg7[%c0_124, %c0_125, %c288] : memref<1x1x324xf32, #tpu.memory_space<vmem>>, vector<1x1x18xf32>
    %206 = vector.shape_cast %205 : vector<1x1x18xf32> to vector<1x18xf32>
    %207 = vector.shape_cast %204 : vector<1x18xf32> to vector<1x1x18xf32>
    tpu.vector_store %arg7[%c0_124, %c0_125, %c288], %207 {strides = array<i32>} : memref<1x1x324xf32, #tpu.memory_space<vmem>>, vector<1x1x18xf32>,
    %208 = vector.extract_strided_slice %139 {offsets = [0, 357], sizes = [1, 18], strides = [1, 1]} : vector<1x375xf32> to vector<1x18xf32>
    %c0_126 = arith.constant 0 : index
    %c0_127 = arith.constant 0 : index
    %c306 = arith.constant 306 : index
    %209 = vector.load %arg7[%c0_126, %c0_127, %c306] : memref<1x1x324xf32, #tpu.memory_space<vmem>>, vector<1x1x18xf32>
    %210 = vector.shape_cast %209 : vector<1x1x18xf32> to vector<1x18xf32>
    %211 = vector.shape_cast %208 : vector<1x18xf32> to vector<1x1x18xf32>
    tpu.vector_store %arg7[%c0_126, %c0_127, %c306], %211 {strides = array<i32>} : memref<1x1x324xf32, #tpu.memory_space<vmem>>, vector<1x1x18xf32>,
    return
  }
  func.func @transform_0(%arg0: i32) -> (i32, i32, i32) {
    %c0_i32 = arith.constant 0 : i32
    %c0_i32_0 = arith.constant 0 : i32
    %c0_i32_1 = arith.constant 0 : i32
    return %arg0, %c0_i32, %c0_i32_0 : i32, i32, i32
  }
  func.func @transform_1(%arg0: i32) -> (i32, i32) {
    %c0_i32 = arith.constant 0 : i32
    %c0_i32_0 = arith.constant 0 : i32
    %c0_i32_1 = arith.constant 0 : i32
    return %c0_i32, %c0_i32_0 : i32, i32
  }
  func.func @transform_2(%arg0: i32) -> (i32, i32) {
    %c0_i32 = arith.constant 0 : i32
    %c0_i32_0 = arith.constant 0 : i32
    %c0_i32_1 = arith.constant 0 : i32
    return %c0_i32, %c0_i32_0 : i32, i32
  }
  func.func @transform_3(%arg0: i32) -> (i32, i32) {
    %c0_i32 = arith.constant 0 : i32
    %c0_i32_0 = arith.constant 0 : i32
    %c0_i32_1 = arith.constant 0 : i32
    return %c0_i32, %c0_i32_0 : i32, i32
  }
  func.func @transform_4(%arg0: i32) -> (i32, i32) {
    %c0_i32 = arith.constant 0 : i32
    %c0_i32_0 = arith.constant 0 : i32
    %c0_i32_1 = arith.constant 0 : i32
    return %c0_i32, %c0_i32_0 : i32, i32
  }
  func.func @transform_5(%arg0: i32) -> (i32, i32) {
    %c0_i32 = arith.constant 0 : i32
    %c0_i32_0 = arith.constant 0 : i32
    %c0_i32_1 = arith.constant 0 : i32
    return %c0_i32, %c0_i32_0 : i32, i32
  }
  func.func @transform_6(%arg0: i32) -> (i32, i32, i32) {
    %c0_i32 = arith.constant 0 : i32
    %c0_i32_0 = arith.constant 0 : i32
    %c0_i32_1 = arith.constant 0 : i32
    return %arg0, %c0_i32, %c0_i32_0 : i32, i32, i32
  }
}

</mosaic_0001>

<llo_original>
// kernel: tpu_custom_call.1
$region0: #{tpu_custom_call.1}
  #allocation0 [shape = 'u32[]', space=smem, size = 0x4, offset = 0x4, fixed_abs, tag = 'smem constant byte address 0x4 - core index']
  #allocation1 [shape = 'u32[144,128]{1,0:T(1,128)}', space=vmem, size = 0x12000, scoped, tag = 'internal scratch']
  #allocation2 [shape = 'f32[4,400]{1,0:T(4,128)}', space=vmem, size = 0x2000, scoped, tag = 'scratch operand']
  #allocation3 [shape = 'f32[8,441]{1,0:T(8,128)}', space=vmem, size = 0x4000, scoped, tag = 'scratch operand']
  #allocation4 [shape = 'f32[1,1]{1,0:T(1,128)S(1)}', space=vmem, size = 0x200, scoped, tag = 'scoped memory for tpu_custom_call.1']
  %s0 = inlined_call_operand.vmem [shape: f32[2,4,256], index: 0, kind: input, shape index: {}]
  %s1 = inlined_call_operand.vmem [shape: f32[8,64], index: 1, kind: input, shape index: {}]
  %s2 = inlined_call_operand.vmem [shape: f32[8,1], index: 2, kind: input, shape index: {}]
  %s3 = inlined_call_operand.vmem [shape: f32[8,1], index: 3, kind: input, shape index: {}]
  %s4 = inlined_call_operand.vmem [shape: f32[1,128], index: 4, kind: input, shape index: {}]
  %s5 = inlined_call_operand.<no memory space> [shape: f32[1,1], index: 5, kind: input, shape index: {}]
  %s6 = inlined_call_operand.hbm [shape: f32[2,1,324], index: 6, kind: output, shape index: {}]
  %s7 = sld [smem:[#allocation0]]
  $region57: #{tpu_custom_call.1} parent=0
    _
  %s9 = ssub.s32 1, %s7
  %s10 = scalar_select 0, %s9, %s7
  %v11 = vstv %s5
  %12 = vst [vmem:[#allocation4] sm:$0x1] %v11
  $region1: #{tpu_custom_call.1} parent=0
    #allocation5 [shape = 'u8[3072]{0}', space=vmem, size = 0xc00, scoped, tag = 'output window, operand 0']
    #allocation6 [shape = 's32[2]{0}', space=sflag, size = 0x8, scoped, tag = 'scoped memory for tpu_custom_call.1']
    %13 = vsyncpa [#allocation6], 0
    %s14 = scalar_lea.sflag [#allocation6], 1
    %15 = vsyncpa %s14, 0
    loop: start=0, step=1, limit=4
    $region2: #{tpu_custom_call.1} parent=1 // loop_pre_header
      _
    $region3: #{tpu_custom_call.1} parent=1 // loop_header
      %s17 = sphi 0, %s21
      %p18 = scmp.ge.s32.totalorder %s17, 4
      %s27 = sphi 0, %s29
      %s30 = sphi 0, %s27
      %s31 = sphi 0, %s30
      %s47 = sphi 0, %s31
      %s51 = sphi 0, %s51
      %s53 = sphi 0, %s51
      %s54 = sphi 0, %s53
      %s68 = sphi 0, %s54
      %s72 = sphi 0, %s72
      %s74 = sphi 0, %s72
      %s75 = sphi 0, %s74
      %s89 = sphi 0, %s75
      %s93 = sphi 0, %s93
      %s95 = sphi 0, %s93
      %s96 = sphi 0, %s95
      %s110 = sphi 0, %s96
      %s114 = sphi 0, %s114
      %s116 = sphi 0, %s114
      %s117 = sphi 0, %s116
      %s131 = sphi 0, %s117
      %s135 = sphi 0, %s135
      %s137 = sphi 0, %s135
      %s138 = sphi 0, %s137
      %s152 = sphi 0, %s138
      %s158 = sphi 0, %s160
      %s161 = sphi 0, %s158
      %s162 = sphi 0, %s161
      %s178 = sphi 0, %s162
    $region4: #{tpu_custom_call.1} parent=1 // loop_header_branch
      %20 = sbr.rel (%p18) target = $region8
    $region5: #{tpu_custom_call.1} parent=1 // loop_body
      %s22 = ssub.s32 %s17, 1
      %s23 = ssub.s32 %s17, 2
      %s24 = sadd.s32 %s17, 1
      %s25 = ssub.s32 %s17, %s24
      %p26 = scmp.eq.s32.totalorder %s25, 0
      %s28 = sadd.s32 %s27, 1
      %s29 = scalar_select %p26, %s27, %s28
      %p32 = pneg %p26
      %p33 = scmp.eq.s32.totalorder %s17, 1
      %p34 = por %p32, %p33
      %p35 = scmp.ne.s32.totalorder %s27, %s30
      %p36 = scmp.eq.s32.totalorder %s17, 0
      %p37 = por %p35, %p36
      %p38 = scmp.ne.s32.totalorder %s27, %s30
      %p39 = scmp.eq.s32.totalorder %s22, 1
      %p40 = por %p38, %p39
      %p41 = scmp.ne.s32.totalorder %s30, %s31
      %p42 = scmp.eq.s32.totalorder %s22, 0
      %p43 = por %p41, %p42
      %p44 = scmp.ne.s32.totalorder %s30, %s31
      %p45 = scmp.eq.s32.totalorder %s23, 1
      %p46 = por %p44, %p45
      %p48 = scmp.ne.s32.totalorder %s31, %s47
      %p49 = scmp.eq.s32.totalorder %s23, 0
      %p50 = por %p48, %p49
      %s52 = sadd.s32 %s51, 1
      %p55 = scmp.eq.s32.totalorder %s17, 1
      %p56 = scmp.ne.s32.totalorder %s51, %s53
      %p57 = scmp.eq.s32.totalorder %s17, 0
      %p58 = por %p56, %p57
      %p59 = scmp.ne.s32.totalorder %s51, %s53
      %p60 = scmp.eq.s32.totalorder %s22, 1
      %p61 = por %p59, %p60
      %p62 = scmp.ne.s32.totalorder %s53, %s54
      %p63 = scmp.eq.s32.totalorder %s22, 0
      %p64 = por %p62, %p63
      %p65 = scmp.ne.s32.totalorder %s53, %s54
      %p66 = scmp.eq.s32.totalorder %s23, 1
      %p67 = por %p65, %p66
      %p69 = scmp.ne.s32.totalorder %s54, %s68
      %p70 = scmp.eq.s32.totalorder %s23, 0
      %p71 = por %p69, %p70
      %s73 = sadd.s32 %s72, 1
      %p76 = scmp.eq.s32.totalorder %s17, 1
      %p77 = scmp.ne.s32.totalorder %s72, %s74
      %p78 = scmp.eq.s32.totalorder %s17, 0
      %p79 = por %p77, %p78
      %p80 = scmp.ne.s32.totalorder %s72, %s74
      %p81 = scmp.eq.s32.totalorder %s22, 1
      %p82 = por %p80, %p81
      %p83 = scmp.ne.s32.totalorder %s74, %s75
      %p84 = scmp.eq.s32.totalorder %s22, 0
      %p85 = por %p83, %p84
      %p86 = scmp.ne.s32.totalorder %s74, %s75
      %p87 = scmp.eq.s32.totalorder %s23, 1
      %p88 = por %p86, %p87
      %p90 = scmp.ne.s32.totalorder %s75, %s89
      %p91 = scmp.eq.s32.totalorder %s23, 0
      %p92 = por %p90, %p91
      %s94 = sadd.s32 %s93, 1
      %p97 = scmp.eq.s32.totalorder %s17, 1
      %p98 = scmp.ne.s32.totalorder %s93, %s95
      %p99 = scmp.eq.s32.totalorder %s17, 0
      %p100 = por %p98, %p99
      %p101 = scmp.ne.s32.totalorder %s93, %s95
      %p102 = scmp.eq.s32.totalorder %s22, 1
      %p103 = por %p101, %p102
      %p104 = scmp.ne.s32.totalorder %s95, %s96
      %p105 = scmp.eq.s32.totalorder %s22, 0
      %p106 = por %p104, %p105
      %p107 = scmp.ne.s32.totalorder %s95, %s96
      %p108 = scmp.eq.s32.totalorder %s23, 1
      %p109 = por %p107, %p108
      %p111 = scmp.ne.s32.totalorder %s96, %s110
      %p112 = scmp.eq.s32.totalorder %s23, 0
      %p113 = por %p111, %p112
      %s115 = sadd.s32 %s114, 1
      %p118 = scmp.eq.s32.totalorder %s17, 1
      %p119 = scmp.ne.s32.totalorder %s114, %s116
      %p120 = scmp.eq.s32.totalorder %s17, 0
      %p121 = por %p119, %p120
      %p122 = scmp.ne.s32.totalorder %s114, %s116
      %p123 = scmp.eq.s32.totalorder %s22, 1
      %p124 = por %p122, %p123
      %p125 = scmp.ne.s32.totalorder %s116, %s117
      %p126 = scmp.eq.s32.totalorder %s22, 0
      %p127 = por %p125, %p126
      %p128 = scmp.ne.s32.totalorder %s116, %s117
      %p129 = scmp.eq.s32.totalorder %s23, 1
      %p130 = por %p128, %p129
      %p132 = scmp.ne.s32.totalorder %s117, %s131
      %p133 = scmp.eq.s32.totalorder %s23, 0
      %p134 = por %p132, %p133
      %s136 = sadd.s32 %s135, 1
      %p139 = scmp.eq.s32.totalorder %s17, 1
      %p140 = scmp.ne.s32.totalorder %s135, %s137
      %p141 = scmp.eq.s32.totalorder %s17, 0
      %p142 = por %p140, %p141
      %p143 = scmp.ne.s32.totalorder %s135, %s137
      %p144 = scmp.eq.s32.totalorder %s22, 1
      %p145 = por %p143, %p144
      %p146 = scmp.ne.s32.totalorder %s137, %s138
      %p147 = scmp.eq.s32.totalorder %s22, 0
      %p148 = por %p146, %p147
      %p149 = scmp.ne.s32.totalorder %s137, %s138
      %p150 = scmp.eq.s32.totalorder %s23, 1
      %p151 = por %p149, %p150
      %p153 = scmp.ne.s32.totalorder %s138, %s152
      %p154 = scmp.eq.s32.totalorder %s23, 0
      %p155 = por %p153, %p154
      %s156 = ssub.s32 %s17, %s24
      %p157 = scmp.eq.s32.totalorder %s156, 0
      %s159 = sadd.s32 %s158, 1
      %s160 = scalar_select %p157, %s158, %s159
      %p163 = pneg %p157
      %p164 = scmp.eq.s32.totalorder %s17, 1
      %p165 = por %p163, %p164
      %p166 = scmp.ne.s32.totalorder %s158, %s161
      %p167 = scmp.eq.s32.totalorder %s17, 0
      %p168 = por %p166, %p167
      %p169 = scmp.ne.s32.totalorder %s158, %s161
      %p170 = scmp.eq.s32.totalorder %s22, 1
      %p171 = por %p169, %p170
      %p172 = scmp.ne.s32.totalorder %s161, %s162
      %p173 = scmp.eq.s32.totalorder %s22, 0
      %p174 = por %p172, %p173
      %p175 = scmp.ne.s32.totalorder %s161, %s162
      %p176 = scmp.eq.s32.totalorder %s23, 1
      %p177 = por %p175, %p176
      %p179 = scmp.ne.s32.totalorder %s162, %s178
      %p180 = scmp.eq.s32.totalorder %s23, 0
      %p181 = por %p179, %p180
      %p182 = scmp.le.s32.totalorder 1, %s17
      %p183 = scmp.lt.s32.totalorder %s17, 3
      %p184 = pnand %p182, %p183
      %p185 = pneg %p184
      // Predicated region
      $region9: #{tpu_custom_call.1} parent=5 // pred_check
        _
      $region10: #{tpu_custom_call.1} parent=5 // pred_check_branch
        %187 = sbr.rel (%p184) target = $region12
      $region11: #{tpu_custom_call.1} parent=5 // pred_region
        %s188 = ssub.s32 %s17, 1
        // Predicated region
        $region13: #{tpu_custom_call.1} parent=11 // pred_check
          %p189 = pneg %p64
        $region14: #{tpu_custom_call.1} parent=11 // pred_check_branch
          %191 = sbr.rel (%p189) target = $region16
        $region15: #{tpu_custom_call.1} parent=11 // pred_region
          _
        $region16: #{tpu_custom_call.1} parent=11 // pred_fallthru
          _
        // Predicated region
        $region17: #{tpu_custom_call.1} parent=11 // pred_check
          %p192 = pneg %p85
        $region18: #{tpu_custom_call.1} parent=11 // pred_check_branch
          %194 = sbr.rel (%p192) target = $region20
        $region19: #{tpu_custom_call.1} parent=11 // pred_region
          _
        $region20: #{tpu_custom_call.1} parent=11 // pred_fallthru
          _
        // Predicated region
        $region21: #{tpu_custom_call.1} parent=11 // pred_check
          %p195 = pneg %p106
        $region22: #{tpu_custom_call.1} parent=11 // pred_check_branch
          %197 = sbr.rel (%p195) target = $region24
        $region23: #{tpu_custom_call.1} parent=11 // pred_region
          _
        $region24: #{tpu_custom_call.1} parent=11 // pred_fallthru
          _
        // Predicated region
        $region25: #{tpu_custom_call.1} parent=11 // pred_check
          %p198 = pneg %p127
        $region26: #{tpu_custom_call.1} parent=11 // pred_check_branch
          %200 = sbr.rel (%p198) target = $region28
        $region27: #{tpu_custom_call.1} parent=11 // pred_region
          _
        $region28: #{tpu_custom_call.1} parent=11 // pred_fallthru
          _
        // Predicated region
        $region29: #{tpu_custom_call.1} parent=11 // pred_check
          %p201 = pneg %p148
        $region30: #{tpu_custom_call.1} parent=11 // pred_check_branch
          %203 = sbr.rel (%p201) target = $region32
        $region31: #{tpu_custom_call.1} parent=11 // pred_region
          _
        $region32: #{tpu_custom_call.1} parent=11 // pred_fallthru
          _
      $region12: #{tpu_custom_call.1} parent=5 // pred_fallthru
        _
      %p204 = scmp.lt.s32.totalorder %s17, 2
      // Predicated region
      $region33: #{tpu_custom_call.1} parent=5 // pred_check
        %p205 = pneg %p204
      $region34: #{tpu_custom_call.1} parent=5 // pred_check_branch
        %207 = sbr.rel (%p205) target = $region36
      $region35: #{tpu_custom_call.1} parent=5 // pred_region
        // Predicated region
        $region37: #{tpu_custom_call.1} parent=35 // pred_check
          %p208 = pneg %p37
        $region38: #{tpu_custom_call.1} parent=35 // pred_check_branch
          %210 = sbr.rel (%p208) target = $region40
        $region39: #{tpu_custom_call.1} parent=35 // pred_region
          %p211 = scmp.lt.s32.totalorder %s17, 1
          %s212 = scalar_select %p211, %s17, 1
          %s213 = smul.addr %s212, 2
          %s214 = smul.addr %s213, 4
          %s215 = scalar_lea.vmem %s0, %s214
        $region40: #{tpu_custom_call.1} parent=35 // pred_fallthru
          _
      $region36: #{tpu_custom_call.1} parent=5 // pred_fallthru
        _
      %p216 = scmp.le.s32.totalorder 1, %s17
      %p217 = scmp.lt.s32.totalorder %s17, 3
      %p218 = pnand %p216, %p217
      %p219 = pneg %p218
      // Predicated region
      $region41: #{tpu_custom_call.1} parent=5 // pred_check
        _
      $region42: #{tpu_custom_call.1} parent=5 // pred_check_branch
        %221 = sbr.rel (%p218) target = $region44
      $region43: #{tpu_custom_call.1} parent=5 // pred_region
        %s222 = ssub.s32 %s17, 1
        %p223 = scmp.lt.s32.totalorder %s22, 1
        %s224 = scalar_select %p223, %s22, 1
        %s225 = smul.addr %s224, 2
        %s226 = smul.addr %s225, 4
        %s227 = scalar_lea.vmem %s0, %s226
        %p228 = pneg %p43
        %p229 = pneg %p40
        %p230 = pneg %p64
        %p231 = pneg %p61
        %p232 = pneg %p85
        %p233 = pneg %p82
        %p234 = pneg %p106
        %p235 = pneg %p103
        %p236 = pneg %p127
        %p237 = pneg %p124
        %p238 = pneg %p148
        %p239 = pneg %p145
        %p240 = pneg %p174
        %p241 = pneg %p171
        %s242 = sand.u32 %s161, 1
        %s243 = scalar_lea.sflag [#allocation6], %s242
        %s244 = sand.u32 %s161, 1
        %s245 = smul.addr %s244, 3
        %s246 = scalar_lea.vmem [#allocation5], %s245
        %p247 = scmp.lt.s32.totalorder %s22, 1
        %s248 = scalar_select %p247, %s22, 1
        %s249 = smul.addr %s248, 2
        %s250 = smul.addr %s249, 4
        %s251 = scalar_lea.vmem %s0, %s250
        %252 = vst [vmem:[#allocation2] sm:$0xff] 0.0
        %vm253 = vcmask 1043456
        %vm254 = vcmask 130052
        %vm255 = vmor %vm254, %vm253
        %256 = vst.msk [vmem:[#allocation2 + $0x8] sm:$0xff] %vm255, 0.0
        %v257 = vld [vmem:[%s251] sm:$0xf]
        %259 = vrot.lane.b32.xlu0 %v257, 42
        %v260 = vpop.permute.xlu0 %259
        %vm262 = vcmask 470352
        %263 = vst.msk [vmem:[#allocation2] sm:$0xf] %vm262, %v260
        %v264 = vld [vmem:[%s251] sm:$0xf]
        %266 = vrot.lane.b32.xlu0 %v264, 46
        %v267 = vpop.permute.xlu0 %266
        %vm269 = vcmask 634352
        %270 = vst.msk [vmem:[#allocation2] sm:$0xf] %vm269, %v267
        %v271 = vld [vmem:[%s251] sm:$0xf]
        %273 = vrot.lane.b32.xlu0 %v271, 50
        %v274 = vpop.permute.xlu0 %273
        %vm276 = vcmask 798352
        %277 = vst.msk [vmem:[#allocation2] sm:$0xf] %vm276, %v274
        %v278 = vld [vmem:[%s251] sm:$0xf]
        %280 = vrot.lane.b32.xlu0 %v278, 54
        %v281 = vpop.permute.xlu0 %280
        %vm283 = vcmask 962352
        %284 = vst.msk [vmem:[#allocation2] sm:$0xf] %vm283, %v281
        %v285 = vld [vmem:[%s251] sm:$0xf]
        %287 = vrot.lane.b32.xlu0 %v285, 58
        %v288 = vpop.permute.xlu0 %287
        %v289 = vrot.slane %v288, 4
        %vm290 = vcmask 474112
        %v291 = vsel %vm290, %v289, %v288
        %vm293 = vcmask 1044432
        %vm294 = vcmask 80900
        %vm295 = vmor %vm294, %vm293
        %296 = vst.msk [vmem:[#allocation2] sm:$0xff] %vm295, %v291
        %v297 = vld [vmem:[%s251] sm:$0xf]
        %299 = vrot.lane.b32.xlu0 %v297, 62
        %v300 = vpop.permute.xlu0 %299
        %vm302 = vcmask 240752
        %303 = vst.msk [vmem:[#allocation2 + $0x4] sm:$0xf] %vm302, %v300
        %v304 = vld [vmem:[%s251] sm:$0xf]
        %306 = vrot.lane.b32.xlu0 %v304, 66
        %v307 = vpop.permute.xlu0 %306
        %vm309 = vcmask 404752
        %310 = vst.msk [vmem:[#allocation2 + $0x4] sm:$0xf] %vm309, %v307
        %v311 = vld [vmem:[%s251] sm:$0xf]
        %313 = vrot.lane.b32.xlu0 %v311, 70
        %v314 = vpop.permute.xlu0 %313
        %vm316 = vcmask 568752
        %317 = vst.msk [vmem:[#allocation2 + $0x4] sm:$0xf] %vm316, %v314
        %v318 = vld [vmem:[%s251 + $0x4] sm:$0xf]
        %320 = vrot.lane.b32.xlu0 %v318, 74
        %v321 = vpop.permute.xlu0 %320
        %vm323 = vcmask 732752
        %324 = vst.msk [vmem:[#allocation2 + $0x4] sm:$0xf] %vm323, %v321
        %v325 = vld [vmem:[%s251 + $0x4] sm:$0xf]
        %327 = vrot.lane.b32.xlu0 %v325, 78
        %v328 = vpop.permute.xlu0 %327
        %vm330 = vcmask 896752
        %331 = vst.msk [vmem:[#allocation2 + $0x4] sm:$0xf] %vm330, %v328
        %v332 = vld [vmem:[%s251 + $0x4] sm:$0xf]
        %334 = vrot.lane.b32.xlu0 %v332, 82
        %v335 = vpop.permute.xlu0 %334
        %v336 = vrot.slane %v335, 4
        %vm337 = vcmask 670720
        %v338 = vsel %vm337, %v336, %v335
        %vm340 = vcmask 1044368
        %vm341 = vcmask 15364
        %vm342 = vmor %vm341, %vm340
        %343 = vst.msk [vmem:[#allocation2 + $0x4] sm:$0xff] %vm342, %v338
        %v344 = vld [vmem:[%s251 + $0x4] sm:$0xf]
        %346 = vrot.lane.b32.xlu0 %v344, 86
        %v347 = vpop.permute.xlu0 %346
        %vm349 = vcmask 175152
        %350 = vst.msk [vmem:[#allocation2 + $0x8] sm:$0xf] %vm349, %v347
        %v351 = vld [vmem:[%s251 + $0x4] sm:$0xf]
        %353 = vrot.lane.b32.xlu0 %v351, 90
        %v354 = vpop.permute.xlu0 %353
        %vm356 = vcmask 339152
        %357 = vst.msk [vmem:[#allocation2 + $0x8] sm:$0xf] %vm356, %v354
        %v358 = vld [vmem:[%s251 + $0x4] sm:$0xf]
        %360 = vrot.lane.b32.xlu0 %v358, 94
        %v361 = vpop.permute.xlu0 %360
        %vm363 = vcmask 503152
        %364 = vst.msk [vmem:[#allocation2 + $0x8] sm:$0xf] %vm363, %v361
        %v365 = vld [vmem:[%s251 + $0x4] sm:$0xf]
        %367 = vrot.lane.b32.xlu0 %v365, 98
        %v368 = vpop.permute.xlu0 %367
        %vm370 = vcmask 667152
        %371 = vst.msk [vmem:[#allocation2 + $0x8] sm:$0xf] %vm370, %v368
        %v372 = vld [vmem:[%s251 + $0x4] sm:$0xf]
        %374 = vrot.lane.b32.xlu0 %v372, 102
        %v375 = vpop.permute.xlu0 %374
        %vm377 = vcmask 831152
        %378 = vst.msk [vmem:[#allocation2 + $0x8] sm:$0xf] %vm377, %v375
        %v379 = vld [vmem:[#allocation2] sm:$0xff]
        %v380 = vld [vmem:[#allocation2 + $0x8] sm:$0xff]
        %v383 = vcombine.high %v379, %v379
        %v385 = vcombine.low %v379, %v379
        %v386 = vcombine.low %v380, %v380
        %387 = vrot.lane.b32.xlu0 %v385, 127
        %v388 = vpop.permute.xlu0 %387
        %389 = vrot.lane.b32.xlu0 %v379, 127
        %v390 = vpop.permute.xlu0 %389
        %391 = vrot.lane.b32.xlu0 %v386, 127
        %v392 = vpop.permute.xlu0 %391
        %vm393 = vcmask 1039360
        %v394 = vsel %vm393, %v388, %v390
        %v395 = vsel %vm393, %v390, %v392
        %399 = vrot.lane.b32.xlu0 %v379, 126
        %v400 = vpop.permute.xlu0 %399
        %401 = vrot.lane.b32.xlu0 %v383, 126
        %v402 = vpop.permute.xlu0 %401
        %403 = vrot.lane.b32.xlu0 %v380, 126
        %v404 = vpop.permute.xlu0 %403
        %vm405 = vcmask 1031168
        %v406 = vsel %vm405, %v400, %v402
        %v407 = vsel %vm405, %v402, %v404
        %411 = vrot.lane.b32.xlu0 %v385, 125
        %v412 = vpop.permute.xlu0 %411
        %413 = vrot.lane.b32.xlu0 %v379, 125
        %v414 = vpop.permute.xlu0 %413
        %415 = vrot.lane.b32.xlu0 %v386, 125
        %v416 = vpop.permute.xlu0 %415
        %vm417 = vcmask 1022976
        %v418 = vsel %vm417, %v412, %v414
        %v419 = vsel %vm417, %v414, %v416
        %423 = vrot.lane.b32.xlu0 %v379, 108
        %v424 = vpop.permute.xlu0 %423
        %425 = vrot.lane.b32.xlu0 %v383, 108
        %v426 = vpop.permute.xlu0 %425
        %427 = vrot.lane.b32.xlu0 %v380, 108
        %v428 = vpop.permute.xlu0 %427
        %vm429 = vcmask 883712
        %v430 = vsel %vm429, %v424, %v426
        %v431 = vsel %vm429, %v426, %v428
        %435 = vrot.lane.b32.xlu0 %v385, 107
        %v436 = vpop.permute.xlu0 %435
        %437 = vrot.lane.b32.xlu0 %v379, 107
        %v438 = vpop.permute.xlu0 %437
        %439 = vrot.lane.b32.xlu0 %v386, 107
        %v440 = vpop.permute.xlu0 %439
        %vm441 = vcmask 875520
        %v442 = vsel %vm441, %v436, %v438
        %v443 = vsel %vm441, %v438, %v440
        %447 = vrot.lane.b32.xlu0 %v379, 106
        %v448 = vpop.permute.xlu0 %447
        %449 = vrot.lane.b32.xlu0 %v383, 106
        %v450 = vpop.permute.xlu0 %449
        %451 = vrot.lane.b32.xlu0 %v380, 106
        %v452 = vpop.permute.xlu0 %451
        %vm453 = vcmask 867328
        %v454 = vsel %vm453, %v448, %v450
        %v455 = vsel %vm453, %v450, %v452
        %459 = vrot.lane.b32.xlu0 %v385, 105
        %v460 = vpop.permute.xlu0 %459
        %461 = vrot.lane.b32.xlu0 %v379, 105
        %v462 = vpop.permute.xlu0 %461
        %463 = vrot.lane.b32.xlu0 %v386, 105
        %v464 = vpop.permute.xlu0 %463
        %vm465 = vcmask 859136
        %v466 = vsel %vm465, %v460, %v462
        %v467 = vsel %vm465, %v462, %v464
        %471 = vrot.lane.b32.xlu0 %v379, 88
        %v472 = vpop.permute.xlu0 %471
        %473 = vrot.lane.b32.xlu0 %v383, 88
        %v474 = vpop.permute.xlu0 %473
        %475 = vrot.lane.b32.xlu0 %v380, 88
        %v476 = vpop.permute.xlu0 %475
        %vm477 = vcmask 719872
        %v478 = vsel %vm477, %v472, %v474
        %v479 = vsel %vm477, %v474, %v476
        %483 = vrot.lane.b32.xlu0 %v385, 87
        %v484 = vpop.permute.xlu0 %483
        %485 = vrot.lane.b32.xlu0 %v379, 87
        %v486 = vpop.permute.xlu0 %485
        %487 = vrot.lane.b32.xlu0 %v386, 87
        %v488 = vpop.permute.xlu0 %487
        %vm489 = vcmask 711680
        %v490 = vsel %vm489, %v484, %v486
        %v491 = vsel %vm489, %v486, %v488
        %495 = vrot.lane.b32.xlu0 %v379, 86
        %v496 = vpop.permute.xlu0 %495
        %497 = vrot.lane.b32.xlu0 %v383, 86
        %v498 = vpop.permute.xlu0 %497
        %499 = vrot.lane.b32.xlu0 %v380, 86
        %v500 = vpop.permute.xlu0 %499
        %vm501 = vcmask 703488
        %v502 = vsel %vm501, %v496, %v498
        %v503 = vsel %vm501, %v498, %v500
        %507 = vrot.lane.b32.xlu0 %v385, 85
        %v508 = vpop.permute.xlu0 %507
        %509 = vrot.lane.b32.xlu0 %v379, 85
        %v510 = vpop.permute.xlu0 %509
        %511 = vrot.lane.b32.xlu0 %v386, 85
        %v512 = vpop.permute.xlu0 %511
        %vm513 = vcmask 695296
        %v514 = vsel %vm513, %v508, %v510
        %v515 = vsel %vm513, %v510, %v512
        %v519 = vcombine.high %v380, %v380
        %520 = vrot.lane.b32.xlu0 %v379, 68
        %v521 = vpop.permute.xlu0 %520
        %522 = vrot.lane.b32.xlu0 %v383, 68
        %v523 = vpop.permute.xlu0 %522
        %524 = vrot.lane.b32.xlu0 %v380, 68
        %v525 = vpop.permute.xlu0 %524
        %526 = vrot.lane.b32.xlu0 %v519, 68
        %v527 = vpop.permute.xlu0 %526
        %vm528 = vcmask 556032
        %v529 = vsel %vm528, %v521, %v523
        %v530 = vsel %vm528, %v523, %v525
        %v531 = vsel %vm528, %v525, %v527
        %535 = vrot.lane.b32.xlu0 %v385, 67
        %v536 = vpop.permute.xlu0 %535
        %537 = vrot.lane.b32.xlu0 %v379, 67
        %v538 = vpop.permute.xlu0 %537
        %539 = vrot.lane.b32.xlu0 %v386, 67
        %v540 = vpop.permute.xlu0 %539
        %541 = vrot.lane.b32.xlu0 %v380, 67
        %v542 = vpop.permute.xlu0 %541
        %vm543 = vcmask 547840
        %v544 = vsel %vm543, %v536, %v538
        %v545 = vsel %vm543, %v538, %v540
        %v546 = vsel %vm543, %v540, %v542
        %550 = vrot.lane.b32.xlu0 %v379, 66
        %v551 = vpop.permute.xlu0 %550
        %552 = vrot.lane.b32.xlu0 %v383, 66
        %v553 = vpop.permute.xlu0 %552
        %554 = vrot.lane.b32.xlu0 %v380, 66
        %v555 = vpop.permute.xlu0 %554
        %556 = vrot.lane.b32.xlu0 %v519, 66
        %v557 = vpop.permute.xlu0 %556
        %vm558 = vcmask 539648
        %v559 = vsel %vm558, %v551, %v553
        %v560 = vsel %vm558, %v553, %v555
        %v561 = vsel %vm558, %v555, %v557
        %565 = vrot.lane.b32.xlu0 %v385, 65
        %v566 = vpop.permute.xlu0 %565
        %567 = vrot.lane.b32.xlu0 %v379, 65
        %v568 = vpop.permute.xlu0 %567
        %569 = vrot.lane.b32.xlu0 %v386, 65
        %v570 = vpop.permute.xlu0 %569
        %571 = vrot.lane.b32.xlu0 %v380, 65
        %v572 = vpop.permute.xlu0 %571
        %vm573 = vcmask 531456
        %v574 = vsel %vm573, %v566, %v568
        %v575 = vsel %vm573, %v568, %v570
        %v576 = vsel %vm573, %v570, %v572
        %v580 = vsel %vm253, %v379, %v394
        %v581 = vsel %vm253, %v383, %v395
        %v582 = vsel %vm253, %v380, %v392
        %v583 = vsel %vm253, %v406, %v418
        %v584 = vsel %vm253, %v407, %v419
        %v585 = vsel %vm253, %v404, %v416
        %v586 = vsel %vm253, %v430, %v442
        %v587 = vsel %vm253, %v431, %v443
        %v588 = vsel %vm253, %v428, %v440
        %v589 = vsel %vm253, %v454, %v466
        %v590 = vsel %vm253, %v455, %v467
        %v591 = vsel %vm253, %v452, %v464
        %v592 = vsel %vm253, %v478, %v490
        %v593 = vsel %vm253, %v479, %v491
        %v594 = vsel %vm253, %v476, %v488
        %v595 = vsel %vm253, %v502, %v514
        %v596 = vsel %vm253, %v503, %v515
        %v597 = vsel %vm253, %v500, %v512
        %v598 = vsel %vm253, %v529, %v544
        %v599 = vsel %vm253, %v530, %v545
        %v600 = vsel %vm253, %v531, %v546
        %v601 = vsel %vm253, %v559, %v574
        %v602 = vsel %vm253, %v560, %v575
        %v603 = vsel %vm253, %v561, %v576
        %v604 = vld [vmem:[%s1] sm:$0xff]
        %vm605 = vcmask 523264
        %v607 = vsel %vm605, %v604, 0
        %609 = vmatprep.subr.mxu0 %v581
        %610 = vmatpush1.msra.mxu0 %v580
        %611 = vmatprep.subr.mxu0 %v584
        %612 = vmatpush1.msra.mxu0 %v583
        %613 = vmatprep.subr.mxu0 %v587
        %614 = vmatpush1.msra.mxu0 %v586
        %615 = vmatprep.subr.mxu0 %v590
        %616 = vmatpush1.msra.mxu0 %v589
        %617 = vmatprep.subr.mxu0 %v593
        %618 = vmatpush1.msra.mxu0 %v592
        %619 = vmatprep.subr.mxu0 %v596
        %620 = vmatpush1.msra.mxu0 %v595
        %621 = vmatprep.subr.mxu0 %v599
        %622 = vmatpush1.msra.mxu0 %v598
        %623 = vmatprep.subr.mxu0 %v602
        %624 = vmatpush1.msra.mxu0 %v601
        %625 = vmatprep.subr.mxu0 0.0
        %626 = vmatpush1.msra.mxu0 0.0
        %627 = vmatprep.subr.mxu0 0.0
        %628 = vmatpush1.msra.mxu0 0.0
        %629 = vmatprep.subr.mxu0 0.0
        %630 = vmatpush1.msra.mxu0 0.0
        %631 = vmatprep.subr.mxu0 0.0
        %632 = vmatpush1.msra.mxu0 0.0
        %633 = vmatprep.subr.mxu0 0.0
        %634 = vmatpush1.msra.mxu0 0.0
        %635 = vmatprep.subr.mxu0 0.0
        %636 = vmatpush1.msra.mxu0 0.0
        %637 = vmatprep.subr.mxu0 0.0
        %638 = vmatpush1.msra.mxu0 0.0
        %639 = vmatprep.subr.mxu0 0.0
        %640 = vmatpush1.msra.mxu0 0.0
        %641 = vmatprep.subr.mxu0 0.0
        %642 = vmatpush1.msra.mxu0 0.0
        %643 = vmatprep.subr.mxu0 0.0
        %644 = vmatpush1.msra.mxu0 0.0
        %645 = vmatprep.subr.mxu0 0.0
        %646 = vmatpush1.msra.mxu0 0.0
        %647 = vmatprep.subr.mxu0 0.0
        %648 = vmatpush1.msra.mxu0 0.0
        %649 = vmatprep.subr.mxu0 0.0
        %650 = vmatpush1.msra.mxu0 0.0
        %651 = vmatprep.subr.mxu0 0.0
        %652 = vmatpush1.msra.mxu0 0.0
        %653 = vmatprep.subr.mxu0 0.0
        %654 = vmatpush1.msra.mxu0 0.0
        %655 = vmatprep.subr.mxu0 0.0
        %656 = vmatpush1.msra.mxu0 0.0
        %657 = vmatprep.subr.mxu0 0.0
        %658 = vmatpush1.msra.mxu0 0.0
        %659 = vmatprep.subr.mxu0 0.0
        %660 = vmatpush1.msra.mxu0 0.0
        %661 = vmatprep.subr.mxu0 0.0
        %662 = vmatpush1.msra.mxu0 0.0
        %663 = vmatprep.subr.mxu0 0.0
        %664 = vmatpush1.msra.mxu0 0.0
        %665 = vmatprep.subr.mxu0 0.0
        %666 = vmatpush1.msra.mxu0 0.0
        %667 = vmatprep.subr.mxu0 0.0
        %668 = vmatpush1.msra.mxu0 0.0
        %669 = vmatprep.subr.mxu0 0.0
        %670 = vmatpush1.msra.mxu0 0.0
        %671 = vmatprep.subr.mxu0 0.0
        %672 = vmatpush1.msra.mxu0 0.0
        %673 = vmatprep.mubr.f32.mxu0 0.0
        %674 = vmatmul.mubr.f32.gmra.mrb[0].mxu0 %v607
        %v675 = vpop.f32.mrb[0].mxu0
        %v676 = vadd.f32 0.0, %v675
        %v677 = vpop.f32.mrb[0].mxu0
        %v678 = vadd.f32 0.0, %v677
        %679 = vdwg.mxu0
        %680 = vmatprep.subr.mxu0 0.0
        %681 = vmatpush1.msra.mxu0 %v582
        %682 = vmatprep.subr.mxu0 0.0
        %683 = vmatpush1.msra.mxu0 %v585
        %684 = vmatprep.subr.mxu0 0.0
        %685 = vmatpush1.msra.mxu0 %v588
        %686 = vmatprep.subr.mxu0 0.0
        %687 = vmatpush1.msra.mxu0 %v591
        %688 = vmatprep.subr.mxu0 0.0
        %689 = vmatpush1.msra.mxu0 %v594
        %690 = vmatprep.subr.mxu0 0.0
        %691 = vmatpush1.msra.mxu0 %v597
        %692 = vmatprep.subr.mxu0 0.0
        %693 = vmatpush1.msra.mxu0 %v600
        %694 = vmatprep.subr.mxu0 0.0
        %695 = vmatpush1.msra.mxu0 %v603
        %696 = vmatprep.subr.mxu0 0.0
        %697 = vmatpush1.msra.mxu0 0.0
        %698 = vmatprep.subr.mxu0 0.0
        %699 = vmatpush1.msra.mxu0 0.0
        %700 = vmatprep.subr.mxu0 0.0
        %701 = vmatpush1.msra.mxu0 0.0
        %702 = vmatprep.subr.mxu0 0.0
        %703 = vmatpush1.msra.mxu0 0.0
        %704 = vmatprep.subr.mxu0 0.0
        %705 = vmatpush1.msra.mxu0 0.0
        %706 = vmatprep.subr.mxu0 0.0
        %707 = vmatpush1.msra.mxu0 0.0
        %708 = vmatprep.subr.mxu0 0.0
        %709 = vmatpush1.msra.mxu0 0.0
        %710 = vmatprep.subr.mxu0 0.0
        %711 = vmatpush1.msra.mxu0 0.0
        %712 = vmatprep.subr.mxu0 0.0
        %713 = vmatpush1.msra.mxu0 0.0
        %714 = vmatprep.subr.mxu0 0.0
        %715 = vmatpush1.msra.mxu0 0.0
        %716 = vmatprep.subr.mxu0 0.0
        %717 = vmatpush1.msra.mxu0 0.0
        %718 = vmatprep.subr.mxu0 0.0
        %719 = vmatpush1.msra.mxu0 0.0
        %720 = vmatprep.subr.mxu0 0.0
        %721 = vmatpush1.msra.mxu0 0.0
        %722 = vmatprep.subr.mxu0 0.0
        %723 = vmatpush1.msra.mxu0 0.0
        %724 = vmatprep.subr.mxu0 0.0
        %725 = vmatpush1.msra.mxu0 0.0
        %726 = vmatprep.subr.mxu0 0.0
        %727 = vmatpush1.msra.mxu0 0.0
        %728 = vmatprep.subr.mxu0 0.0
        %729 = vmatpush1.msra.mxu0 0.0
        %730 = vmatprep.subr.mxu0 0.0
        %731 = vmatpush1.msra.mxu0 0.0
        %732 = vmatprep.subr.mxu0 0.0
        %733 = vmatpush1.msra.mxu0 0.0
        %734 = vmatprep.subr.mxu0 0.0
        %735 = vmatpush1.msra.mxu0 0.0
        %736 = vmatprep.subr.mxu0 0.0
        %737 = vmatpush1.msra.mxu0 0.0
        %738 = vmatprep.subr.mxu0 0.0
        %739 = vmatpush1.msra.mxu0 0.0
        %740 = vmatprep.subr.mxu0 0.0
        %741 = vmatpush1.msra.mxu0 0.0
        %742 = vmatprep.subr.mxu0 0.0
        %743 = vmatpush1.msra.mxu0 0.0
        %744 = vmatprep.mubr.f32.mxu0 0.0
        %745 = vmatmul.mubr.f32.gmra.mrb[0].mxu0 %v607
        %v746 = vpop.f32.mrb[0].mxu0
        %v747 = vadd.f32 0.0, %v746
        %v748 = vpop.f32.mrb[0].mxu0
        %749 = vdwg.mxu0
        %v750 = vld [vmem:[%s2] sm:$0xff]
        %752 = vset.pattern.permute.xlu0 0
        %753 = vperm.xlu0 %752, %v750
        %v754 = vpop.permute.xlu0 %753
        %v756 = vmul.f32 %v676, %v754
        %v757 = vmul.f32 %v678, %v754
        %v758 = vmul.f32 %v747, %v754
        %v759 = vld [vmem:[%s3] sm:$0xff]
        %761 = vset.pattern.permute.xlu0 0
        %762 = vperm.xlu0 %761, %v759
        %v763 = vpop.permute.xlu0 %762
        %v765 = vadd.f32 %v756, %v763
        %v766 = vadd.f32 %v757, %v763
        %v767 = vadd.f32 %v758, %v763
        %vm768 = vcmp.gt.f32.partialorder %v765, 0.0
        %vm769 = vcmp.gt.f32.partialorder %v766, 0.0
        %vm770 = vcmp.gt.f32.partialorder %v767, 0.0
        %v771 = vmul.f32 %v765, 0.2
        %v772 = vmul.f32 %v766, 0.2
        %v773 = vmul.f32 %v767, 0.2
        %v774 = vsel %vm768, %v765, %v771
        %v775 = vsel %vm769, %v766, %v772
        %v776 = vsel %vm770, %v767, %v773
        %777 = vst [vmem:[#allocation3] sm:$0xff] 0.0
        %778 = vst [vmem:[#allocation3 + $0x8] sm:$0xff] 0.0
        %779 = vst [vmem:[#allocation3 + $0x10] sm:$0xff] 0.0
        %vm780 = vcmask 465920
        %781 = vst.msk [vmem:[#allocation3 + $0x18] sm:$0xff] %vm780, 0.0
        %783 = vrot.lane.b32.xlu0 %v774, 44
        %v784 = vpop.permute.xlu0 %783
        %vm786 = vcmask 499040
        %787 = vst.msk [vmem:[#allocation3] sm:$0xff] %vm786, %v784
        %788 = vrot.lane.b32.xlu0 %v774, 45
        %v789 = vpop.permute.xlu0 %788
        %vm791 = vcmask 671240
        %792 = vst.msk [vmem:[#allocation3] sm:$0xff] %vm791, %v789
        %793 = vrot.lane.b32.xlu0 %v774, 46
        %v794 = vpop.permute.xlu0 %793
        %vm796 = vcmask 843440
        %797 = vst.msk [vmem:[#allocation3] sm:$0xff] %vm796, %v794
        %798 = vrot.lane.b32.xlu0 %v774, 47
        %v799 = vpop.permute.xlu0 %798
        %vm801 = vcmask 1015640
        %802 = vst.msk [vmem:[#allocation3] sm:$0xff] %vm801, %v799
        %803 = vrot.lane.b32.xlu0 %v774, 48
        %v804 = vpop.permute.xlu0 %803
        %vm806 = vcmask 138240
        %807 = vst.msk [vmem:[#allocation3 + $0x8] sm:$0xff] %vm806, %v804
        %808 = vrot.lane.b32.xlu0 %v774, 49
        %v809 = vpop.permute.xlu0 %808
        %vm811 = vcmask 310440
        %812 = vst.msk [vmem:[#allocation3 + $0x8] sm:$0xff] %vm811, %v809
        %814 = vrot.lane.b32.xlu0 %v774, 50
        %v815 = vpop.permute.xlu0 %814
        %816 = vrot.lane.b32.xlu0 %v775, 50
        %v817 = vpop.permute.xlu0 %816
        %vm818 = vcmask 408576
        %v819 = vsel %vm818, %v815, %v817
        %vm821 = vcmask 482640
        %822 = vst.msk [vmem:[#allocation3 + $0x8] sm:$0xff] %vm821, %v819
        %823 = vrot.lane.b32.xlu0 %v775, 51
        %v824 = vpop.permute.xlu0 %823
        %vm826 = vcmask 654840
        %827 = vst.msk [vmem:[#allocation3 + $0x8] sm:$0xff] %vm826, %v824
        %828 = vrot.lane.b32.xlu0 %v775, 52
        %v829 = vpop.permute.xlu0 %828
        %vm831 = vcmask 827040
        %832 = vst.msk [vmem:[#allocation3 + $0x8] sm:$0xff] %vm831, %v829
        %833 = vrot.lane.b32.xlu0 %v775, 53
        %v834 = vpop.permute.xlu0 %833
        %vm836 = vcmask 999240
        %837 = vst.msk [vmem:[#allocation3 + $0x8] sm:$0xff] %vm836, %v834
        %838 = vrot.lane.b32.xlu0 %v775, 54
        %v839 = vpop.permute.xlu0 %838
        %vm841 = vcmask 1048560
        %842 = vst.msk [vmem:[#allocation3 + $0x8] sm:$0xff] %vm841, %v839
        %vm843 = vcmask 121856
        %844 = vst.msk [vmem:[#allocation3 + $0x10] sm:$0xff] %vm843, %v839
        %845 = vrot.lane.b32.xlu0 %v775, 55
        %v846 = vpop.permute.xlu0 %845
        %vm848 = vcmask 294040
        %849 = vst.msk [vmem:[#allocation3 + $0x10] sm:$0xff] %vm848, %v846
        %851 = vrot.lane.b32.xlu0 %v775, 56
        %v852 = vpop.permute.xlu0 %851
        %853 = vrot.lane.b32.xlu0 %v776, 56
        %v854 = vpop.permute.xlu0 %853
        %vm855 = vcmask 457728
        %v856 = vsel %vm855, %v852, %v854
        %vm858 = vcmask 466240
        %859 = vst.msk [vmem:[#allocation3 + $0x10] sm:$0xff] %vm858, %v856
        %860 = vrot.lane.b32.xlu0 %v776, 57
        %v861 = vpop.permute.xlu0 %860
        %vm863 = vcmask 638440
        %864 = vst.msk [vmem:[#allocation3 + $0x10] sm:$0xff] %vm863, %v861
        %865 = vrot.lane.b32.xlu0 %v776, 58
        %v866 = vpop.permute.xlu0 %865
        %vm868 = vcmask 810640
        %869 = vst.msk [vmem:[#allocation3 + $0x10] sm:$0xff] %vm868, %v866
        %870 = vrot.lane.b32.xlu0 %v776, 59
        %v871 = vpop.permute.xlu0 %870
        %vm873 = vcmask 982840
        %874 = vst.msk [vmem:[#allocation3 + $0x10] sm:$0xff] %vm873, %v871
        %875 = vrot.lane.b32.xlu0 %v776, 60
        %v876 = vpop.permute.xlu0 %875
        %vm878 = vcmask 1048544
        %879 = vst.msk [vmem:[#allocation3 + $0x10] sm:$0xff] %vm878, %v876
        %vm880 = vcmask 105472
        %881 = vst.msk [vmem:[#allocation3 + $0x18] sm:$0xff] %vm880, %v876
        %v882 = vld [vmem:[#allocation3] sm:$0xff]
        %v883 = vld [vmem:[#allocation3 + $0x8] sm:$0xff]
        %v884 = vld [vmem:[#allocation3 + $0x10] sm:$0xff]
        %v885 = vld [vmem:[#allocation3 + $0x18] sm:$0xff]
        %889 = vrot.lane.b32.xlu0 %v882, 127
        %v890 = vpop.permute.xlu0 %889
        %891 = vrot.lane.b32.xlu0 %v883, 127
        %v892 = vpop.permute.xlu0 %891
        %893 = vrot.lane.b32.xlu0 %v884, 127
        %v894 = vpop.permute.xlu0 %893
        %v895 = vsel %vm393, %v890, %v892
        %v896 = vsel %vm393, %v892, %v894
        %900 = vrot.lane.b32.xlu0 %v882, 126
        %v901 = vpop.permute.xlu0 %900
        %902 = vrot.lane.b32.xlu0 %v883, 126
        %v903 = vpop.permute.xlu0 %902
        %904 = vrot.lane.b32.xlu0 %v884, 126
        %v905 = vpop.permute.xlu0 %904
        %v906 = vsel %vm405, %v901, %v903
        %v907 = vsel %vm405, %v903, %v905
        %911 = vrot.lane.b32.xlu0 %v882, 125
        %v912 = vpop.permute.xlu0 %911
        %913 = vrot.lane.b32.xlu0 %v883, 125
        %v914 = vpop.permute.xlu0 %913
        %915 = vrot.lane.b32.xlu0 %v884, 125
        %v916 = vpop.permute.xlu0 %915
        %v917 = vsel %vm417, %v912, %v914
        %v918 = vsel %vm417, %v914, %v916
        %923 = vrot.lane.b32.xlu0 %v882, 107
        %v924 = vpop.permute.xlu0 %923
        %925 = vrot.lane.b32.xlu0 %v883, 107
        %v926 = vpop.permute.xlu0 %925
        %927 = vrot.lane.b32.xlu0 %v884, 107
        %v928 = vpop.permute.xlu0 %927
        %929 = vrot.lane.b32.xlu0 %v885, 107
        %v930 = vpop.permute.xlu0 %929
        %v931 = vsel %vm441, %v924, %v926
        %v932 = vsel %vm441, %v926, %v928
        %v933 = vsel %vm441, %v928, %v930
        %937 = vrot.lane.b32.xlu0 %v882, 106
        %v938 = vpop.permute.xlu0 %937
        %939 = vrot.lane.b32.xlu0 %v883, 106
        %v940 = vpop.permute.xlu0 %939
        %941 = vrot.lane.b32.xlu0 %v884, 106
        %v942 = vpop.permute.xlu0 %941
        %943 = vrot.lane.b32.xlu0 %v885, 106
        %v944 = vpop.permute.xlu0 %943
        %v945 = vsel %vm453, %v938, %v940
        %v946 = vsel %vm453, %v940, %v942
        %v947 = vsel %vm453, %v942, %v944
        %951 = vrot.lane.b32.xlu0 %v882, 105
        %v952 = vpop.permute.xlu0 %951
        %953 = vrot.lane.b32.xlu0 %v883, 105
        %v954 = vpop.permute.xlu0 %953
        %955 = vrot.lane.b32.xlu0 %v884, 105
        %v956 = vpop.permute.xlu0 %955
        %957 = vrot.lane.b32.xlu0 %v885, 105
        %v958 = vpop.permute.xlu0 %957
        %v959 = vsel %vm465, %v952, %v954
        %v960 = vsel %vm465, %v954, %v956
        %v961 = vsel %vm465, %v956, %v958
        %965 = vrot.lane.b32.xlu0 %v882, 104
        %v966 = vpop.permute.xlu0 %965
        %967 = vrot.lane.b32.xlu0 %v883, 104
        %v968 = vpop.permute.xlu0 %967
        %969 = vrot.lane.b32.xlu0 %v884, 104
        %v970 = vpop.permute.xlu0 %969
        %971 = vrot.lane.b32.xlu0 %v885, 104
        %v972 = vpop.permute.xlu0 %971
        %vm973 = vcmask 850944
        %v974 = vsel %vm973, %v966, %v968
        %v975 = vsel %vm973, %v968, %v970
        %v976 = vsel %vm973, %v970, %v972
        %980 = vrot.lane.b32.xlu0 %v882, 86
        %v981 = vpop.permute.xlu0 %980
        %982 = vrot.lane.b32.xlu0 %v883, 86
        %v983 = vpop.permute.xlu0 %982
        %984 = vrot.lane.b32.xlu0 %v884, 86
        %v985 = vpop.permute.xlu0 %984
        %986 = vrot.lane.b32.xlu0 %v885, 86
        %v987 = vpop.permute.xlu0 %986
        %v988 = vsel %vm501, %v981, %v983
        %v989 = vsel %vm501, %v983, %v985
        %v990 = vsel %vm501, %v985, %v987
        %994 = vrot.lane.b32.xlu0 %v882, 85
        %v995 = vpop.permute.xlu0 %994
        %996 = vrot.lane.b32.xlu0 %v883, 85
        %v997 = vpop.permute.xlu0 %996
        %998 = vrot.lane.b32.xlu0 %v884, 85
        %v999 = vpop.permute.xlu0 %998
        %1000 = vrot.lane.b32.xlu0 %v885, 85
        %v1001 = vpop.permute.xlu0 %1000
        %v1002 = vsel %vm513, %v995, %v997
        %v1003 = vsel %vm513, %v997, %v999
        %v1004 = vsel %vm513, %v999, %v1001
        %1008 = vrot.lane.b32.xlu0 %v882, 84
        %v1009 = vpop.permute.xlu0 %1008
        %1010 = vrot.lane.b32.xlu0 %v883, 84
        %v1011 = vpop.permute.xlu0 %1010
        %1012 = vrot.lane.b32.xlu0 %v884, 84
        %v1013 = vpop.permute.xlu0 %1012
        %1014 = vrot.lane.b32.xlu0 %v885, 84
        %v1015 = vpop.permute.xlu0 %1014
        %vm1016 = vcmask 687104
        %v1017 = vsel %vm1016, %v1009, %v1011
        %v1018 = vsel %vm1016, %v1011, %v1013
        %v1019 = vsel %vm1016, %v1013, %v1015
        %1023 = vrot.lane.b32.xlu0 %v882, 83
        %v1024 = vpop.permute.xlu0 %1023
        %1025 = vrot.lane.b32.xlu0 %v883, 83
        %v1026 = vpop.permute.xlu0 %1025
        %1027 = vrot.lane.b32.xlu0 %v884, 83
        %v1028 = vpop.permute.xlu0 %1027
        %1029 = vrot.lane.b32.xlu0 %v885, 83
        %v1030 = vpop.permute.xlu0 %1029
        %vm1031 = vcmask 678912
        %v1032 = vsel %vm1031, %v1024, %v1026
        %v1033 = vsel %vm1031, %v1026, %v1028
        %v1034 = vsel %vm1031, %v1028, %v1030
        %1038 = vrot.lane.b32.xlu0 %v882, 65
        %v1039 = vpop.permute.xlu0 %1038
        %1040 = vrot.lane.b32.xlu0 %v883, 65
        %v1041 = vpop.permute.xlu0 %1040
        %1042 = vrot.lane.b32.xlu0 %v884, 65
        %v1043 = vpop.permute.xlu0 %1042
        %1044 = vrot.lane.b32.xlu0 %v885, 65
        %v1045 = vpop.permute.xlu0 %1044
        %v1046 = vsel %vm573, %v1039, %v1041
        %v1047 = vsel %vm573, %v1041, %v1043
        %v1048 = vsel %vm573, %v1043, %v1045
        %1052 = vrot.lane.b32.xlu0 %v882, 64
        %v1053 = vpop.permute.xlu0 %1052
        %1054 = vrot.lane.b32.xlu0 %v883, 64
        %v1055 = vpop.permute.xlu0 %1054
        %1056 = vrot.lane.b32.xlu0 %v884, 64
        %v1057 = vpop.permute.xlu0 %1056
        %1058 = vrot.lane.b32.xlu0 %v885, 64
        %v1059 = vpop.permute.xlu0 %1058
        %v1060 = vsel %vm605, %v1053, %v1055
        %v1061 = vsel %vm605, %v1055, %v1057
        %v1062 = vsel %vm605, %v1057, %v1059
        %1066 = vrot.lane.b32.xlu0 %v882, 63
        %v1067 = vpop.permute.xlu0 %1066
        %1068 = vrot.lane.b32.xlu0 %v883, 63
        %v1069 = vpop.permute.xlu0 %1068
        %1070 = vrot.lane.b32.xlu0 %v884, 63
        %v1071 = vpop.permute.xlu0 %1070
        %1072 = vrot.lane.b32.xlu0 %v885, 63
        %v1073 = vpop.permute.xlu0 %1072
        %vm1074 = vcmask 515072
        %v1075 = vsel %vm1074, %v1067, %v1069
        %v1076 = vsel %vm1074, %v1069, %v1071
        %v1077 = vsel %vm1074, %v1071, %v1073
        %1081 = vrot.lane.b32.xlu0 %v882, 62
        %v1082 = vpop.permute.xlu0 %1081
        %1083 = vrot.lane.b32.xlu0 %v883, 62
        %v1084 = vpop.permute.xlu0 %1083
        %1085 = vrot.lane.b32.xlu0 %v884, 62
        %v1086 = vpop.permute.xlu0 %1085
        %1087 = vrot.lane.b32.xlu0 %v885, 62
        %v1088 = vpop.permute.xlu0 %1087
        %vm1089 = vcmask 506880
        %v1090 = vsel %vm1089, %v1082, %v1084
        %v1091 = vsel %vm1089, %v1084, %v1086
        %v1092 = vsel %vm1089, %v1086, %v1088
        %v1096 = vld [vmem:[%s4] sm:$0x1]
        %v1097 = vld [vmem:[#allocation4] sm:$0x1]
        %1099 = vset.pattern.permute.xlu0 0
        %1100 = vperm.xlu0 %1099, %v1097
        %v1101 = vpop.permute.xlu0 %1100
        %v1103 = vlaneseq
        %v1104 = vshrl.u32 %v1103, 7
        %v1105 = vsub.s32 0, %v1104
        %v1106 = vrot.slane %v1101, %v1105
        %1107 = vmatprep.subr.mxu0 %v883
        %1108 = vmatpush1.msra.mxu0 %v882
        %1109 = vmatprep.subr.mxu0 %v896
        %1110 = vmatpush1.msra.mxu0 %v895
        %1111 = vmatprep.subr.mxu0 %v907
        %1112 = vmatpush1.msra.mxu0 %v906
        %1113 = vmatprep.subr.mxu0 %v918
        %1114 = vmatpush1.msra.mxu0 %v917
        %1115 = vmatprep.subr.mxu0 %v932
        %1116 = vmatpush1.msra.mxu0 %v931
        %1117 = vmatprep.subr.mxu0 %v946
        %1118 = vmatpush1.msra.mxu0 %v945
        %1119 = vmatprep.subr.mxu0 %v960
        %1120 = vmatpush1.msra.mxu0 %v959
        %1121 = vmatprep.subr.mxu0 %v975
        %1122 = vmatpush1.msra.mxu0 %v974
        %1123 = vmatprep.subr.mxu0 %v989
        %1124 = vmatpush1.msra.mxu0 %v988
        %1125 = vmatprep.subr.mxu0 %v1003
        %1126 = vmatpush1.msra.mxu0 %v1002
        %1127 = vmatprep.subr.mxu0 %v1018
        %1128 = vmatpush1.msra.mxu0 %v1017
        %1129 = vmatprep.subr.mxu0 %v1033
        %1130 = vmatpush1.msra.mxu0 %v1032
        %1131 = vmatprep.subr.mxu0 %v1047
        %1132 = vmatpush1.msra.mxu0 %v1046
        %1133 = vmatprep.subr.mxu0 %v1061
        %1134 = vmatpush1.msra.mxu0 %v1060
        %1135 = vmatprep.subr.mxu0 %v1076
        %1136 = vmatpush1.msra.mxu0 %v1075
        %1137 = vmatprep.subr.mxu0 %v1091
        %1138 = vmatpush1.msra.mxu0 %v1090
        %1139 = vmatprep.subr.mxu0 0.0
        %1140 = vmatpush1.msra.mxu0 0.0
        %1141 = vmatprep.subr.mxu0 0.0
        %1142 = vmatpush1.msra.mxu0 0.0
        %1143 = vmatprep.subr.mxu0 0.0
        %1144 = vmatpush1.msra.mxu0 0.0
        %1145 = vmatprep.subr.mxu0 0.0
        %1146 = vmatpush1.msra.mxu0 0.0
        %1147 = vmatprep.subr.mxu0 0.0
        %1148 = vmatpush1.msra.mxu0 0.0
        %1149 = vmatprep.subr.mxu0 0.0
        %1150 = vmatpush1.msra.mxu0 0.0
        %1151 = vmatprep.subr.mxu0 0.0
        %1152 = vmatpush1.msra.mxu0 0.0
        %1153 = vmatprep.subr.mxu0 0.0
        %1154 = vmatpush1.msra.mxu0 0.0
        %1155 = vmatprep.subr.mxu0 0.0
        %1156 = vmatpush1.msra.mxu0 0.0
        %1157 = vmatprep.subr.mxu0 0.0
        %1158 = vmatpush1.msra.mxu0 0.0
        %1159 = vmatprep.subr.mxu0 0.0
        %1160 = vmatpush1.msra.mxu0 0.0
        %1161 = vmatprep.subr.mxu0 0.0
        %1162 = vmatpush1.msra.mxu0 0.0
        %1163 = vmatprep.subr.mxu0 0.0
        %1164 = vmatpush1.msra.mxu0 0.0
        %1165 = vmatprep.subr.mxu0 0.0
        %1166 = vmatpush1.msra.mxu0 0.0
        %1167 = vmatprep.subr.mxu0 0.0
        %1168 = vmatpush1.msra.mxu0 0.0
        %1169 = vmatprep.subr.mxu0 0.0
        %1170 = vmatpush1.msra.mxu0 0.0
        %1171 = vmatprep.mubr.f32.mxu0 0.0
        %1172 = vmatmul.mubr.f32.gmra.mrb[0].mxu0 %v1096
        %v1173 = vpop.f32.mrb[0].mxu0
        %v1174 = vadd.f32 %v1106, %v1173
        %v1175 = vpop.f32.mrb[0].mxu0
        %v1176 = vadd.f32 %v1106, %v1175
        %1177 = vdwg.mxu0
        %1178 = vmatprep.subr.mxu0 0.0
        %1179 = vmatpush1.msra.mxu0 %v884
        %1180 = vmatprep.subr.mxu0 0.0
        %1181 = vmatpush1.msra.mxu0 %v894
        %1182 = vmatprep.subr.mxu0 0.0
        %1183 = vmatpush1.msra.mxu0 %v905
        %1184 = vmatprep.subr.mxu0 0.0
        %1185 = vmatpush1.msra.mxu0 %v916
        %1186 = vmatprep.subr.mxu0 0.0
        %1187 = vmatpush1.msra.mxu0 %v933
        %1188 = vmatprep.subr.mxu0 0.0
        %1189 = vmatpush1.msra.mxu0 %v947
        %1190 = vmatprep.subr.mxu0 0.0
        %1191 = vmatpush1.msra.mxu0 %v961
        %1192 = vmatprep.subr.mxu0 0.0
        %1193 = vmatpush1.msra.mxu0 %v976
        %1194 = vmatprep.subr.mxu0 0.0
        %1195 = vmatpush1.msra.mxu0 %v990
        %1196 = vmatprep.subr.mxu0 0.0
        %1197 = vmatpush1.msra.mxu0 %v1004
        %1198 = vmatprep.subr.mxu0 0.0
        %1199 = vmatpush1.msra.mxu0 %v1019
        %1200 = vmatprep.subr.mxu0 0.0
        %1201 = vmatpush1.msra.mxu0 %v1034
        %1202 = vmatprep.subr.mxu0 0.0
        %1203 = vmatpush1.msra.mxu0 %v1048
        %1204 = vmatprep.subr.mxu0 0.0
        %1205 = vmatpush1.msra.mxu0 %v1062
        %1206 = vmatprep.subr.mxu0 0.0
        %1207 = vmatpush1.msra.mxu0 %v1077
        %1208 = vmatprep.subr.mxu0 0.0
        %1209 = vmatpush1.msra.mxu0 %v1092
        %1210 = vmatprep.subr.mxu0 0.0
        %1211 = vmatpush1.msra.mxu0 0.0
        %1212 = vmatprep.subr.mxu0 0.0
        %1213 = vmatpush1.msra.mxu0 0.0
        %1214 = vmatprep.subr.mxu0 0.0
        %1215 = vmatpush1.msra.mxu0 0.0
        %1216 = vmatprep.subr.mxu0 0.0
        %1217 = vmatpush1.msra.mxu0 0.0
        %1218 = vmatprep.subr.mxu0 0.0
        %1219 = vmatpush1.msra.mxu0 0.0
        %1220 = vmatprep.subr.mxu0 0.0
        %1221 = vmatpush1.msra.mxu0 0.0
        %1222 = vmatprep.subr.mxu0 0.0
        %1223 = vmatpush1.msra.mxu0 0.0
        %1224 = vmatprep.subr.mxu0 0.0
        %1225 = vmatpush1.msra.mxu0 0.0
        %1226 = vmatprep.subr.mxu0 0.0
        %1227 = vmatpush1.msra.mxu0 0.0
        %1228 = vmatprep.subr.mxu0 0.0
        %1229 = vmatpush1.msra.mxu0 0.0
        %1230 = vmatprep.subr.mxu0 0.0
        %1231 = vmatpush1.msra.mxu0 0.0
        %1232 = vmatprep.subr.mxu0 0.0
        %1233 = vmatpush1.msra.mxu0 0.0
        %1234 = vmatprep.subr.mxu0 0.0
        %1235 = vmatpush1.msra.mxu0 0.0
        %1236 = vmatprep.subr.mxu0 0.0
        %1237 = vmatpush1.msra.mxu0 0.0
        %1238 = vmatprep.subr.mxu0 0.0
        %1239 = vmatpush1.msra.mxu0 0.0
        %1240 = vmatprep.subr.mxu0 0.0
        %1241 = vmatpush1.msra.mxu0 0.0
        %1242 = vmatprep.mubr.f32.mxu0 0.0
        %1243 = vmatmul.mubr.f32.gmra.mrb[0].mxu0 %v1096
        %v1244 = vpop.f32.mrb[0].mxu0
        %v1245 = vadd.f32 %v1106, %v1244
        %v1246 = vpop.f32.mrb[0].mxu0
        %1247 = vdwg.mxu0
        %v1248 = vlaneseq
        %vm1249 = vcmp.ge.s32.totalorder %v1248, 0
        %vm1250 = vcmp.lt.s32.totalorder %v1248, 18
        %vm1251 = vmand %vm1249, %vm1250
        %1252 = vst.msk [vmem:[%s246] sm:$0x1] %vm1251, %v1174
        %v1255 = vunpack.c.l.s4 1966171168
        %v1256 = vunpack.c.0.s8 %v1255
        %v1257 = vlaneseq
        %v1258 = vshrl.u32 %v1257, 7
        %v1259 = vsub.s32 %v1256, %v1258
        %v1260 = vrot.slane %v1174, %v1259
        %v1262 = vunpack.c.l.s4 1966171168
        %v1263 = vunpack.c.0.s8 %v1262
        %v1264 = vlaneseq
        %v1265 = vshrl.u32 %v1264, 7
        %v1266 = vsub.s32 %v1263, %v1265
        %v1267 = vrot.slane %v1260, %v1266
        %1268 = vrot.lane.b32.xlu0 %v1267, 125
        %v1269 = vpop.permute.xlu0 %1268
        %vm1271 = vcmp.ge.s32.totalorder %v1248, 18
        %vm1272 = vcmp.lt.s32.totalorder %v1248, 36
        %vm1273 = vmand %vm1271, %vm1272
        %1274 = vst.msk [vmem:[%s246] sm:$0x1] %vm1273, %v1269
        %1275 = vrot.lane.b32.xlu0 %v1267, 122
        %v1276 = vpop.permute.xlu0 %1275
        %vm1278 = vcmp.ge.s32.totalorder %v1248, 36
        %vm1279 = vcmp.lt.s32.totalorder %v1248, 54
        %vm1280 = vmand %vm1278, %vm1279
        %1281 = vst.msk [vmem:[%s246] sm:$0x1] %vm1280, %v1276
        %1282 = vrot.lane.b32.xlu0 %v1267, 119
        %v1283 = vpop.permute.xlu0 %1282
        %vm1285 = vcmp.ge.s32.totalorder %v1248, 54
        %vm1286 = vcmp.lt.s32.totalorder %v1248, 72
        %vm1287 = vmand %vm1285, %vm1286
        %1288 = vst.msk [vmem:[%s246] sm:$0x1] %vm1287, %v1283
        %1289 = vrot.lane.b32.xlu0 %v1267, 116
        %v1290 = vpop.permute.xlu0 %1289
        %vm1292 = vcmp.ge.s32.totalorder %v1248, 72
        %vm1293 = vcmp.lt.s32.totalorder %v1248, 90
        %vm1294 = vmand %vm1292, %vm1293
        %1295 = vst.msk [vmem:[%s246] sm:$0x1] %vm1294, %v1290
        %1296 = vrot.lane.b32.xlu0 %v1267, 113
        %v1297 = vpop.permute.xlu0 %1296
        %vm1299 = vcmp.ge.s32.totalorder %v1248, 90
        %vm1300 = vcmp.lt.s32.totalorder %v1248, 108
        %vm1301 = vmand %vm1299, %vm1300
        %1302 = vst.msk [vmem:[%s246] sm:$0x1] %vm1301, %v1297
        %v1304 = vcombine.low %v1174, %v1176
        %v1306 = vunpack.c.l.s4 1966171168
        %v1307 = vunpack.c.0.s8 %v1306
        %v1308 = vlaneseq
        %v1309 = vshrl.u32 %v1308, 7
        %v1310 = vsub.s32 %v1307, %v1309
        %v1311 = vrot.slane %v1304, %v1310
        %v1313 = vunpack.c.l.s4 1966171168
        %v1314 = vunpack.c.0.s8 %v1313
        %v1315 = vlaneseq
        %v1316 = vshrl.u32 %v1315, 7
        %v1317 = vsub.s32 %v1314, %v1316
        %v1318 = vrot.slane %v1311, %v1317
        %1319 = vrot.lane.b32.xlu0 %v1318, 110
        %v1320 = vpop.permute.xlu0 %1319
        %v1321 = vrot.slane %v1320, 1
        %vm1322 = vcmask 900096
        %v1323 = vsel %vm1322, %v1320, %v1321
        %vm1325 = vcmp.ge.s32.totalorder %v1248, 108
        %vm1326 = vcmp.lt.s32.totalorder %v1248, 126
        %vm1327 = vmand %vm1325, %vm1326
        %1328 = vst.msk [vmem:[%s246] sm:$0x1] %vm1327, %v1323
        %v1330 = vunpack.c.l.s4 1966171168
        %v1331 = vunpack.c.0.s8 %v1330
        %v1332 = vlaneseq
        %v1333 = vshrl.u32 %v1332, 7
        %v1334 = vsub.s32 %v1331, %v1333
        %v1335 = vrot.slane %v1176, %v1334
        %v1337 = vunpack.c.l.s4 1966171168
        %v1338 = vunpack.c.0.s8 %v1337
        %v1339 = vlaneseq
        %v1340 = vshrl.u32 %v1339, 7
        %v1341 = vsub.s32 %v1338, %v1340
        %v1342 = vrot.slane %v1335, %v1341
        %1343 = vrot.lane.b32.xlu0 %v1342, 107
        %v1344 = vpop.permute.xlu0 %1343
        %v1345 = vrot.slane %v1344, 7
        %v1346 = vsel %vm441, %v1345, %v1344
        %vm1348 = vcmp.ge.s32.totalorder %v1248, 126
        %vm1349 = vcmp.lt.s32.totalorder %v1248, 144
        %vm1350 = vmand %vm1348, %vm1349
        %1351 = vst.msk [vmem:[%s246] sm:$0x3] %vm1350, %v1346
        %1352 = vrot.lane.b32.xlu0 %v1342, 104
        %v1353 = vpop.permute.xlu0 %1352
        %vm1355 = vcmp.ge.s32.totalorder %v1248, 16
        %vm1356 = vcmp.lt.s32.totalorder %v1248, 34
        %vm1357 = vmand %vm1355, %vm1356
        %1358 = vst.msk [vmem:[%s246 + $0x1] sm:$0x1] %vm1357, %v1353
        %1359 = vrot.lane.b32.xlu0 %v1342, 101
        %v1360 = vpop.permute.xlu0 %1359
        %vm1362 = vcmp.ge.s32.totalorder %v1248, 34
        %vm1363 = vcmp.lt.s32.totalorder %v1248, 52
        %vm1364 = vmand %vm1362, %vm1363
        %1365 = vst.msk [vmem:[%s246 + $0x1] sm:$0x1] %vm1364, %v1360
        %1366 = vrot.lane.b32.xlu0 %v1342, 98
        %v1367 = vpop.permute.xlu0 %1366
        %vm1369 = vcmp.ge.s32.totalorder %v1248, 52
        %vm1370 = vcmp.lt.s32.totalorder %v1248, 70
        %vm1371 = vmand %vm1369, %vm1370
        %1372 = vst.msk [vmem:[%s246 + $0x1] sm:$0x1] %vm1371, %v1367
        %1373 = vrot.lane.b32.xlu0 %v1342, 95
        %v1374 = vpop.permute.xlu0 %1373
        %vm1376 = vcmp.ge.s32.totalorder %v1248, 70
        %vm1377 = vcmp.lt.s32.totalorder %v1248, 88
        %vm1378 = vmand %vm1376, %vm1377
        %1379 = vst.msk [vmem:[%s246 + $0x1] sm:$0x1] %vm1378, %v1374
        %v1381 = vcombine.low %v1176, %v1245
        %v1383 = vunpack.c.l.s4 1966171168
        %v1384 = vunpack.c.0.s8 %v1383
        %v1385 = vlaneseq
        %v1386 = vshrl.u32 %v1385, 7
        %v1387 = vsub.s32 %v1384, %v1386
        %v1388 = vrot.slane %v1381, %v1387
        %v1390 = vunpack.c.l.s4 1966171168
        %v1391 = vunpack.c.0.s8 %v1390
        %v1392 = vlaneseq
        %v1393 = vshrl.u32 %v1392, 7
        %v1394 = vsub.s32 %v1391, %v1393
        %v1395 = vrot.slane %v1388, %v1394
        %1396 = vrot.lane.b32.xlu0 %v1395, 92
        %v1397 = vpop.permute.xlu0 %1396
        %v1398 = vrot.slane %v1397, 1
        %vm1399 = vcmask 752640
        %v1400 = vsel %vm1399, %v1397, %v1398
        %vm1402 = vcmp.ge.s32.totalorder %v1248, 88
        %vm1403 = vcmp.lt.s32.totalorder %v1248, 106
        %vm1404 = vmand %vm1402, %vm1403
        %1405 = vst.msk [vmem:[%s246 + $0x1] sm:$0x1] %vm1404, %v1400
        %v1407 = vunpack.c.l.s4 1966171168
        %v1408 = vunpack.c.0.s8 %v1407
        %v1409 = vlaneseq
        %v1410 = vshrl.u32 %v1409, 7
        %v1411 = vsub.s32 %v1408, %v1410
        %v1412 = vrot.slane %v1245, %v1411
        %v1414 = vunpack.c.l.s4 1966171168
        %v1415 = vunpack.c.0.s8 %v1414
        %v1416 = vlaneseq
        %v1417 = vshrl.u32 %v1416, 7
        %v1418 = vsub.s32 %v1415, %v1417
        %v1419 = vrot.slane %v1412, %v1418
        %1420 = vrot.lane.b32.xlu0 %v1419, 89
        %v1421 = vpop.permute.xlu0 %1420
        %vm1423 = vcmp.ge.s32.totalorder %v1248, 106
        %vm1424 = vcmp.lt.s32.totalorder %v1248, 124
        %vm1425 = vmand %vm1423, %vm1424
        %1426 = vst.msk [vmem:[%s246 + $0x1] sm:$0x1] %vm1425, %v1421
        %1427 = vrot.lane.b32.xlu0 %v1419, 86
        %v1428 = vpop.permute.xlu0 %1427
        %v1429 = vrot.slane %v1428, 7
        %v1430 = vsel %vm501, %v1429, %v1428
        %vm1432 = vcmp.ge.s32.totalorder %v1248, 124
        %vm1433 = vcmp.lt.s32.totalorder %v1248, 142
        %vm1434 = vmand %vm1432, %vm1433
        %1435 = vst.msk [vmem:[%s246 + $0x1] sm:$0x3] %vm1434, %v1430
        %1436 = vrot.lane.b32.xlu0 %v1419, 83
        %v1437 = vpop.permute.xlu0 %1436
        %vm1439 = vcmp.ge.s32.totalorder %v1248, 14
        %vm1440 = vcmp.lt.s32.totalorder %v1248, 32
        %vm1441 = vmand %vm1439, %vm1440
        %1442 = vst.msk [vmem:[%s246 + $0x2] sm:$0x1] %vm1441, %v1437
        %1443 = vrot.lane.b32.xlu0 %v1419, 80
        %v1444 = vpop.permute.xlu0 %1443
        %vm1446 = vcmp.ge.s32.totalorder %v1248, 32
        %vm1447 = vcmp.lt.s32.totalorder %v1248, 50
        %vm1448 = vmand %vm1446, %vm1447
        %1449 = vst.msk [vmem:[%s246 + $0x2] sm:$0x1] %vm1448, %v1444
        %1450 = vrot.lane.b32.xlu0 %v1419, 77
        %v1451 = vpop.permute.xlu0 %1450
        %vm1453 = vcmp.ge.s32.totalorder %v1248, 50
        %vm1454 = vcmp.lt.s32.totalorder %v1248, 68
        %vm1455 = vmand %vm1453, %vm1454
        %1456 = vst.msk [vmem:[%s246 + $0x2] sm:$0x1] %vm1455, %v1451
        %s1457 = sand.u32 %s161, 1
        %s1458 = scalar_lea.sflag [#allocation6], %s1457
        %s1459 = sand.u32 %s161, 1
        %s1460 = smul.addr %s1459, 3
        %s1461 = scalar_lea.vmem [#allocation5], %s1460
        // Predicated region
        $region45: #{tpu_custom_call.1} parent=43 // pred_check
          %p1462 = pneg %p171
        $region46: #{tpu_custom_call.1} parent=43 // pred_check_branch
          %1464 = sbr.rel (%p1462) target = $region48
        $region47: #{tpu_custom_call.1} parent=43 // pred_region
          %s1466 = ssub.s32 48, 48
          %1467 = vsyncadd %s1458, %s1466
          %s1468 = smul.addr %s22, 3
          %s1469 = smul.addr %s1468, 16
          %s1470 = scalar_lea.hbm %s6, %s1469
          %s1472 = sshll.u32 %s1461, 4
          %s1473 = int_to_ptr.vmem [resolvable:$true] %s1472
          %1475 = dma.vmem_to_hbm [thread:$0]  %s1473, 48, %s1470, %s1458
        $region48: #{tpu_custom_call.1} parent=43 // pred_fallthru
          _
      $region44: #{tpu_custom_call.1} parent=5 // pred_fallthru
        _
      %p1476 = scmp.le.s32.totalorder 2, %s17
      // Predicated region
      $region49: #{tpu_custom_call.1} parent=5 // pred_check
        %p1477 = pneg %p1476
      $region50: #{tpu_custom_call.1} parent=5 // pred_check_branch
        %1479 = sbr.rel (%p1477) target = $region52
      $region51: #{tpu_custom_call.1} parent=5 // pred_region
        %s1480 = ssub.s32 %s17, 2
        // Predicated region
        $region53: #{tpu_custom_call.1} parent=51 // pred_check
          %p1481 = pneg %p177
        $region54: #{tpu_custom_call.1} parent=51 // pred_check_branch
          %1483 = sbr.rel (%p1481) target = $region56
        $region55: #{tpu_custom_call.1} parent=51 // pred_region
          %s1484 = sand.u32 %s162, 1
          %s1485 = scalar_lea.sflag [#allocation6], %s1484
          %s1486 = sand.u32 %s162, 1
          %s1487 = smul.addr %s1486, 3
          %s1488 = scalar_lea.vmem [#allocation5], %s1487
          %1489 = dma.done %s1485, 48
        $region56: #{tpu_custom_call.1} parent=51 // pred_fallthru
          _
      $region52: #{tpu_custom_call.1} parent=5 // pred_fallthru
        _
    $region6: #{tpu_custom_call.1} parent=1 // loop_footer
      %s21 = sadd.s32 1, %s17
    $region7: #{tpu_custom_call.1} parent=1 // loop_footer_branch
      %16 = sbr.rel target = $region3
    $region8: #{tpu_custom_call.1} parent=1 // loop_exit
      _
    %1490 = vsyncpa [#allocation6], 1
    %s1491 = scalar_lea.sflag [#allocation6], 1
    %1492 = vsyncpa %s1491, 1

</llo_original>
